<compile_context>
chip_gen: v7x
topology: tpu7x:2x2x1
jax: 0.10.0
libtpu: 0.0.40
codegen_flags: <defaults>
</compile_context>

<pallas_src>
import functools

import jax
import jax.numpy as jnp
from jax import lax
from jax.experimental import pallas as pl
from jax.experimental.pallas import tpu as pltpu

# ----- SNN hyper-parameters (forward-pass constants) -----
DECAY = 0.9        # LIF membrane decay
THRESHOLD = 1.0    # LIF firing threshold


def _round_up(v, m):
    return ((v + m - 1) // m) * m


def _snn_kernel(x_ref, p_ref, o_ref, *, time_steps, in_size, hidden, out_size,
                o_pad, r2, use_mxu_fc2):
    """fc1 -> (LIF -> fc2 -> spike) x T, fully resident in VMEM."""
    I, H, O = in_size, hidden, out_size
    x = x_ref[...]                                 # (tb, I)
    tb = x.shape[0]

    # Single resident parameter slab; cheap static jnp slices of the load.
    p = p_ref[...]                                 # (rows, width)
    w1 = p[0:I, 0:H]                               # (I, H)
    b1 = p[I:I + 1, 0:H]                           # (1, H)

    # fc1 is loop-invariant -> one MXU matmul outside the time loop.
    # (If I/H ever grow large, cast x/w1 to bf16 here with
    #  preferred_element_type=f32; at these widths it is noise.)
    h1 = jnp.dot(x, w1, preferred_element_type=jnp.float32) + b1   # (tb, H)

    scale = 1.0 / time_steps
    # Guard the unroll: full unroll only for small T; partial unroll otherwise
    # to keep LLO overlap without blowing live ranges / compile time.
    unroll = True if time_steps <= 32 else 4

    def lif(mem1):
        mem1 = DECAY * mem1 + h1
        fired = mem1 > THRESHOLD
        s1 = fired.astype(jnp.float32)
        mem1 = jnp.where(fired, 0.0, mem1)         # hard reset-to-zero
        return s1, mem1

    if use_mxu_fc2:
        # ---- MXU fc2: one (tb,H)x(H,o_pad) matmul per step; its latency
        #      hides under the serial mem1 chain.  Output accumulator is the
        #      lane-dense store tile, so there is no epilogue scatter. ----
        w2p = p[r2:r2 + H, 0:o_pad]                # (H, o_pad), zero-padded
        neg_b2 = p[r2 + H:r2 + H + 1, 0:o_pad]     # (1, o_pad), +1e30 in pads

        def step(_, carry):
            mem1, acc = carry
            s1, mem1 = lif(mem1)
            h2 = jnp.dot(s1, w2p, preferred_element_type=jnp.float32)
            acc = acc + (h2 > neg_b2).astype(jnp.float32)
            return mem1, acc

        init = (jnp.zeros((tb, H), jnp.float32),
                jnp.zeros((tb, o_pad), jnp.float32))
        _, acc = lax.fori_loop(0, time_steps, step, init, unroll=unroll)
        o_ref[...] = acc * scale                   # lane-dense full-vreg store
    else:
        # ---- VPU/XLU fc2 for tiny batch tiles: per output column mul + lane
        #      reduce.  Weight rows stay (1, H); the per-step mul broadcasts
        #      sublanes (no hoisted (tb, H) constants).  Both columns are
        #      accumulated in a single (tb, O) array. ----
        w2_rows = [p[r2 + o:r2 + o + 1, 0:H] for o in range(O)]   # (1, H) each
        neg_b2 = p[r2 + O:r2 + O + 1, 0:O]                        # (1, O)
        col_id = lax.broadcasted_iota(jnp.int32, (1, O), 1)       # hoisted

        def step(_, carry):
            mem1, acc = carry
            s1, mem1 = lif(mem1)
            s2 = jnp.zeros((tb, O), jnp.float32)
            for o in range(O):
                h2_o = jnp.sum(s1 * w2_rows[o], axis=1, keepdims=True)  # (tb,1)
                s2_o = (h2_o > neg_b2[:, o:o + 1]).astype(jnp.float32)
                s2 = jnp.where(col_id == o, s2_o, s2)
            return mem1, acc + s2

        init = (jnp.zeros((tb, H), jnp.float32),
                jnp.zeros((tb, O), jnp.float32))
        _, acc = lax.fori_loop(0, time_steps, step, init, unroll=unroll)
        # One-time scatter of the O columns into the lane-dense output tile.
        lane = lax.broadcasted_iota(jnp.int32, (tb, o_pad), 1)
        out = jnp.zeros((tb, o_pad), jnp.float32)
        for o in range(O):
            out = jnp.where(lane == o, acc[:, o:o + 1] * scale, out)
        o_ref[...] = out


def _pack_params(w1, b1, w2, b2, *, o_pad, use_mxu_fc2):
    """Pack fc1/fc2 parameters into one pre-padded f32 slab (single DMA)."""
    I, H = w1.shape
    O = w2.shape[1]
    r2 = _round_up(I + 1, 8)        # fc2 section starts on a sublane boundary
    if use_mxu_fc2:
        width = max(H, o_pad)
        rows = _round_up(r2 + H + 1, 8)
    else:
        width = max(H, O)
        rows = _round_up(r2 + O + 1, 8)
    slab = jnp.zeros((rows, width), jnp.float32)
    slab = slab.at[0:I, 0:H].set(w1.astype(jnp.float32))
    slab = slab.at[I, 0:H].set(b1.astype(jnp.float32))
    # -b2 folded into the spike threshold; padded lanes +1e30 -> never spike.
    neg_row = jnp.full((width,), 1e30, jnp.float32).at[0:O].set(
        -b2.astype(jnp.float32))
    if use_mxu_fc2:
        slab = slab.at[r2:r2 + H, 0:O].set(w2.astype(jnp.float32))
        slab = slab.at[r2 + H, :].set(neg_row)
    else:
        slab = slab.at[r2:r2 + O, 0:H].set(w2.T.astype(jnp.float32))
        slab = slab.at[r2 + O, :].set(neg_row)
    return slab, r2


def _pick_batch_tile(B, max_tb=64):
    """Batch tile: >=2 grid tiles when possible (v7x has 2 TensorCores and
    shards only across grid steps of a parallel axis), capped at 64 rows so the
    fully unrolled time loop stays inside the 64-vreg file (H < 128 arrays
    waste lanes, so tb=128 would spill)."""
    half = B // 2
    if B >= 16 and half % 8 == 0 and half <= max_tb:
        return half                       # two (or more) even grid tiles
    for tb in range(min(B, max_tb), 7, -8):
        if B % tb == 0:                   # never leave a ragged last tile
            return tb
    return 8


def snn_binary_classifier(x, w1, b1, w2, b2, *, time_steps):
    """x: (B, input_size) f32.  Returns (B, output_size) f32 firing rates."""
    B, I = x.shape
    H = w1.shape[1]
    O = w2.shape[1]
    assert B % 8 == 0, "batch must be a multiple of 8 (sublane tile)"

    o_pad = _round_up(O, 128)              # lane-dense output tile
    tb = _pick_batch_tile(B)
    assert B % tb == 0
    grid = (B // tb,)

    use_mxu_fc2 = tb >= 64                 # MXU fc2 only pays off for big tiles
    slab, r2 = _pack_params(w1, b1.reshape(-1), w2, b2.reshape(-1),
                            o_pad=o_pad, use_mxu_fc2=use_mxu_fc2)

    kernel = functools.partial(
        _snn_kernel, time_steps=time_steps, in_size=I, hidden=H, out_size=O,
        o_pad=o_pad, r2=r2, use_mxu_fc2=use_mxu_fc2)

    fc2_n = o_pad if use_mxu_fc2 else O
    flops = 2 * B * I * H + time_steps * (2 * B * H * fc2_n + 6 * B * H
                                          + 2 * B * fc2_n)
    bytes_accessed = 4 * (B * I + slab.size + B * o_pad)

    out = pl.pallas_call(
        kernel,
        out_shape=jax.ShapeDtypeStruct((B, o_pad), jnp.float32),
        grid=grid,
        in_specs=[
            pl.BlockSpec((tb, I), lambda i: (i, 0)),        # x: batch-tiled
            pl.BlockSpec(slab.shape, lambda i: (0, 0)),     # packed params
        ],
        out_specs=pl.BlockSpec((tb, o_pad), lambda i: (i, 0)),
        compiler_params=pltpu.CompilerParams(
            dimension_semantics=("parallel",),
            # Footprint is <1 MiB; conservative limit also fits v7x's smaller
            # 64 MiB physical / 32 MiB scoped VMEM if shapes ever grow.
            vmem_limit_bytes=32 << 20,
        ),
        cost_estimate=pl.CostEstimate(
            flops=flops, transcendentals=0, bytes_accessed=bytes_accessed),
    )(x, slab)
    return out[:, :O]


def reference_forward(x, w1, b1, w2, b2, *, time_steps):
    """Pure-JAX reference mirroring the PyTorch loop exactly."""
    mem1 = jnp.zeros((x.shape[0], w1.shape[1]), jnp.float32)
    out_spikes = jnp.zeros((x.shape[0], w2.shape[1]), jnp.float32)
    for _ in range(time_steps):
        h1 = x @ w1 + b1
        mem1 = DECAY * mem1 + h1
        s1 = (mem1 > THRESHOLD).astype(jnp.float32)
        mem1 = mem1 * (1.0 - s1)
        h2 = s1 @ w2 + b2
        s2 = (h2 > 0.0).astype(jnp.float32)
        out_spikes = out_spikes + s2
    return out_spikes / time_steps


if __name__ == "__main__":
    # Small shapes consistent with the module: x is (batch, input_size).
    input_size, hidden_size, output_size, time_steps = 16, 32, 2, 16

    key = jax.random.PRNGKey(0)
    kx, kw1, kb1, kw2, kb2 = jax.random.split(key, 5)

    # Deterministic parameter init (PyTorch-Linear-style uniform bounds).
    bound1 = 1.0 / (input_size ** 0.5)
    bound2 = 1.0 / (hidden_size ** 0.5)
    w1 = jax.random.uniform(kw1, (input_size, hidden_size), jnp.float32,
                            -bound1, bound1)
    b1 = jax.random.uniform(kb1, (hidden_size,), jnp.float32, -bound1, bound1)
    w2 = jax.random.uniform(kw2, (hidden_size, output_size), jnp.float32,
                            -bound2, bound2)
    b2 = jax.random.uniform(kb2, (output_size,), jnp.float32, -bound2, bound2)

    # --- Small batch: 2 grid tiles of tb=8 -> VPU/XLU fc2 path. ---
    x_small = jax.random.normal(kx, (16, input_size), dtype=jnp.float32)
    out_small = jax.block_until_ready(
        snn_binary_classifier(x_small, w1, b1, w2, b2, time_steps=time_steps))
    ref_small = reference_forward(x_small, w1, b1.reshape(1, -1), w2,
                                  b2.reshape(1, -1), time_steps=time_steps)
    assert out_small.shape == (16, output_size)
    assert jnp.allclose(out_small, ref_small, atol=1e-5), (out_small, ref_small)

    # --- Larger batch: 2 grid tiles of tb=64 -> MXU fc2 + lane-dense acc. ---
    # Batch is a tiling of the already-verified rows so the binary spike
    # comparisons hit exactly the same (non-boundary) threshold values, keeping
    # the exact check robust to f32 reassociation at spike thresholds.
    x_big = jnp.tile(x_small, (8, 1))                      # (128, input_size)
    out_big = jax.block_until_ready(
        snn_binary_classifier(x_big, w1, b1, w2, b2, time_steps=time_steps))
    ref_big = reference_forward(x_big, w1, b1.reshape(1, -1), w2,
                                b2.reshape(1, -1), time_steps=time_steps)
    assert out_big.shape == (128, output_size)
    assert jnp.allclose(out_big, ref_big, atol=1e-5), (out_big, ref_big)

    print("KERNEL_OK")
</pallas_src>

<mosaic_0001>
module attributes {stable_mosaic.version = 11 : i64} {
  func.func @_snn_kernel(%arg0: i32, %arg1: memref<8x16xf32, #tpu.memory_space<vmem>>, %arg2: memref<32x32xf32, #tpu.memory_space<vmem>>, %arg3: memref<8x128xf32, #tpu.memory_space<vmem>>) attributes {dimension_semantics = [#tpu.dimension_semantics<parallel>], iteration_bounds = array<i64: 2>, scalar_prefetch = 0 : i64, scratch_operands = 0 : i64, tpu.core_type = #tpu.core_type<tc>, window_params = [{transform_indices = @transform_0, window_bounds = array<i64: 8, 16>}, {pipeline_mode = #tpu.pipeline_mode<synchronous>, transform_indices = @transform_1, window_bounds = array<i64: 32, 32>}, {transform_indices = @transform_2, window_bounds = array<i64: 8, 128>}]} {
    %c0 = arith.constant 0 : index
    %c0_0 = arith.constant 0 : index
    %0 = vector.load %arg1[%c0, %c0_0] : memref<8x16xf32, #tpu.memory_space<vmem>>, vector<8x16xf32>
    %c0_1 = arith.constant 0 : index
    %c0_2 = arith.constant 0 : index
    %1 = vector.load %arg2[%c0_1, %c0_2] : memref<32x32xf32, #tpu.memory_space<vmem>>, vector<32x32xf32>
    %2 = vector.extract_strided_slice %1 {offsets = [0, 0], sizes = [16, 32], strides = [1, 1]} : vector<32x32xf32> to vector<16x32xf32>
    %3 = vector.extract_strided_slice %1 {offsets = [16, 0], sizes = [1, 32], strides = [1, 1]} : vector<32x32xf32> to vector<1x32xf32>
    %cst = arith.constant dense<0.000000e+00> : vector<8x32xf32>
    %4 = tpu.matmul %0, %2, %cst {dimension_numbers = #tpu.dot_dimension_numbers<[1], [0], [0], [1], [0, 0, 1, 1], [], []>} : vector<8x16xf32>, vector<16x32xf32>, vector<8x32xf32> -> vector<8x32xf32>
    %5 = vector.broadcast %3 : vector<1x32xf32> to vector<8x32xf32>
    %6 = arith.addf %4, %5 : vector<8x32xf32>
    %7 = vector.extract_strided_slice %1 {offsets = [24, 0], sizes = [1, 32], strides = [1, 1]} : vector<32x32xf32> to vector<1x32xf32>
    %8 = vector.extract_strided_slice %1 {offsets = [25, 0], sizes = [1, 32], strides = [1, 1]} : vector<32x32xf32> to vector<1x32xf32>
    %9 = vector.extract_strided_slice %1 {offsets = [26, 0], sizes = [1, 2], strides = [1, 1]} : vector<32x32xf32> to vector<1x2xf32>
    %10 = tpu.iota {dimensions = array<i32: 1>} : vector<1x2xi32>
    %cst_3 = arith.constant 0.000000e+00 : f32
    %11 = vector.broadcast %cst_3 : f32 to vector<8x32xf32>
    %cst_4 = arith.constant 0.000000e+00 : f32
    %12 = vector.broadcast %cst_4 : f32 to vector<8x2xf32>
    %c0_i32 = arith.constant 0 : i32
    %cst_5 = arith.constant 0.899999976 : f32
    %13 = vector.broadcast %cst_5 : f32 to vector<8x32xf32>
    %14 = arith.mulf %13, %11 : vector<8x32xf32>
    %15 = arith.addf %14, %6 : vector<8x32xf32>
    %cst_6 = arith.constant 1.000000e+00 : f32
    %16 = vector.broadcast %cst_6 : f32 to vector<8x32xf32>
    %17 = arith.cmpf ogt, %15, %16 : vector<8x32xf32>
    %18 = arith.extui %17 : vector<8x32xi1> to vector<8x32xi32>
    %19 = arith.sitofp %18 : vector<8x32xi32> to vector<8x32xf32>
    %cst_7 = arith.constant 0.000000e+00 : f32
    %20 = vector.broadcast %cst_7 : f32 to vector<8x32xf32>
    %21 = arith.select %17, %20, %15 : vector<8x32xi1>, vector<8x32xf32>
    %cst_8 = arith.constant 0.000000e+00 : f32
    %22 = vector.broadcast %cst_8 : f32 to vector<8x2xf32>
    %23 = vector.broadcast %7 : vector<1x32xf32> to vector<8x32xf32>
    %24 = arith.mulf %19, %23 : vector<8x32xf32>
    %cst_9 = arith.constant dense<0.000000e+00> : vector<8xf32>
    %25 = vector.multi_reduction <add>, %24, %cst_9 [1] : vector<8x32xf32> to vector<8xf32>
    %26 = vector.shape_cast %25 : vector<8xf32> to vector<8x1xf32>
    %27 = vector.extract_strided_slice %9 {offsets = [0, 0], sizes = [1, 1], strides = [1, 1]} : vector<1x2xf32> to vector<1x1xf32>
    %28 = vector.broadcast %27 : vector<1x1xf32> to vector<8x1xf32>
    %29 = arith.cmpf ogt, %26, %28 : vector<8x1xf32>
    %30 = arith.extui %29 : vector<8x1xi1> to vector<8x1xi32>
    %31 = arith.sitofp %30 : vector<8x1xi32> to vector<8x1xf32>
    %c0_i32_10 = arith.constant 0 : i32
    %32 = vector.broadcast %c0_i32_10 : i32 to vector<1x2xi32>
    %33 = arith.cmpi eq, %10, %32 : vector<1x2xi32>
    %34 = vector.shape_cast %33 : vector<1x2xi1> to vector<1x2xi1>
    %35 = vector.broadcast %34 : vector<1x2xi1> to vector<8x2xi1>
    %36 = vector.shape_cast %31 : vector<8x1xf32> to vector<8x1xf32>
    %37 = vector.broadcast %36 : vector<8x1xf32> to vector<8x2xf32>
    %38 = arith.select %35, %37, %22 : vector<8x2xi1>, vector<8x2xf32>
    %39 = vector.broadcast %8 : vector<1x32xf32> to vector<8x32xf32>
    %40 = arith.mulf %19, %39 : vector<8x32xf32>
    %cst_11 = arith.constant dense<0.000000e+00> : vector<8xf32>
    %41 = vector.multi_reduction <add>, %40, %cst_11 [1] : vector<8x32xf32> to vector<8xf32>
    %42 = vector.shape_cast %41 : vector<8xf32> to vector<8x1xf32>
    %43 = vector.extract_strided_slice %9 {offsets = [0, 1], sizes = [1, 1], strides = [1, 1]} : vector<1x2xf32> to vector<1x1xf32>
    %44 = vector.broadcast %43 : vector<1x1xf32> to vector<8x1xf32>
    %45 = arith.cmpf ogt, %42, %44 : vector<8x1xf32>
    %46 = arith.extui %45 : vector<8x1xi1> to vector<8x1xi32>
    %47 = arith.sitofp %46 : vector<8x1xi32> to vector<8x1xf32>
    %c1_i32 = arith.constant 1 : i32
    %48 = vector.broadcast %c1_i32 : i32 to vector<1x2xi32>
    %49 = arith.cmpi eq, %10, %48 : vector<1x2xi32>
    %50 = vector.shape_cast %49 : vector<1x2xi1> to vector<1x2xi1>
    %51 = vector.broadcast %50 : vector<1x2xi1> to vector<8x2xi1>
    %52 = vector.shape_cast %47 : vector<8x1xf32> to vector<8x1xf32>
    %53 = vector.broadcast %52 : vector<8x1xf32> to vector<8x2xf32>
    %54 = arith.select %51, %53, %38 : vector<8x2xi1>, vector<8x2xf32>
    %55 = arith.addf %12, %54 : vector<8x2xf32>
    %c1_i32_12 = arith.constant 1 : i32
    %cst_13 = arith.constant 0.899999976 : f32
    %56 = vector.broadcast %cst_13 : f32 to vector<8x32xf32>
    %57 = arith.mulf %56, %21 : vector<8x32xf32>
    %58 = arith.addf %57, %6 : vector<8x32xf32>
    %cst_14 = arith.constant 1.000000e+00 : f32
    %59 = vector.broadcast %cst_14 : f32 to vector<8x32xf32>
    %60 = arith.cmpf ogt, %58, %59 : vector<8x32xf32>
    %61 = arith.extui %60 : vector<8x32xi1> to vector<8x32xi32>
    %62 = arith.sitofp %61 : vector<8x32xi32> to vector<8x32xf32>
    %cst_15 = arith.constant 0.000000e+00 : f32
    %63 = vector.broadcast %cst_15 : f32 to vector<8x32xf32>
    %64 = arith.select %60, %63, %58 : vector<8x32xi1>, vector<8x32xf32>
    %cst_16 = arith.constant 0.000000e+00 : f32
    %65 = vector.broadcast %cst_16 : f32 to vector<8x2xf32>
    %66 = vector.broadcast %7 : vector<1x32xf32> to vector<8x32xf32>
    %67 = arith.mulf %62, %66 : vector<8x32xf32>
    %cst_17 = arith.constant dense<0.000000e+00> : vector<8xf32>
    %68 = vector.multi_reduction <add>, %67, %cst_17 [1] : vector<8x32xf32> to vector<8xf32>
    %69 = vector.shape_cast %68 : vector<8xf32> to vector<8x1xf32>
    %70 = vector.extract_strided_slice %9 {offsets = [0, 0], sizes = [1, 1], strides = [1, 1]} : vector<1x2xf32> to vector<1x1xf32>
    %71 = vector.broadcast %70 : vector<1x1xf32> to vector<8x1xf32>
    %72 = arith.cmpf ogt, %69, %71 : vector<8x1xf32>
    %73 = arith.extui %72 : vector<8x1xi1> to vector<8x1xi32>
    %74 = arith.sitofp %73 : vector<8x1xi32> to vector<8x1xf32>
    %c0_i32_18 = arith.constant 0 : i32
    %75 = vector.broadcast %c0_i32_18 : i32 to vector<1x2xi32>
    %76 = arith.cmpi eq, %10, %75 : vector<1x2xi32>
    %77 = vector.shape_cast %76 : vector<1x2xi1> to vector<1x2xi1>
    %78 = vector.broadcast %77 : vector<1x2xi1> to vector<8x2xi1>
    %79 = vector.shape_cast %74 : vector<8x1xf32> to vector<8x1xf32>
    %80 = vector.broadcast %79 : vector<8x1xf32> to vector<8x2xf32>
    %81 = arith.select %78, %80, %65 : vector<8x2xi1>, vector<8x2xf32>
    %82 = vector.broadcast %8 : vector<1x32xf32> to vector<8x32xf32>
    %83 = arith.mulf %62, %82 : vector<8x32xf32>
    %cst_19 = arith.constant dense<0.000000e+00> : vector<8xf32>
    %84 = vector.multi_reduction <add>, %83, %cst_19 [1] : vector<8x32xf32> to vector<8xf32>
    %85 = vector.shape_cast %84 : vector<8xf32> to vector<8x1xf32>
    %86 = vector.extract_strided_slice %9 {offsets = [0, 1], sizes = [1, 1], strides = [1, 1]} : vector<1x2xf32> to vector<1x1xf32>
    %87 = vector.broadcast %86 : vector<1x1xf32> to vector<8x1xf32>
    %88 = arith.cmpf ogt, %85, %87 : vector<8x1xf32>
    %89 = arith.extui %88 : vector<8x1xi1> to vector<8x1xi32>
    %90 = arith.sitofp %89 : vector<8x1xi32> to vector<8x1xf32>
    %c1_i32_20 = arith.constant 1 : i32
    %91 = vector.broadcast %c1_i32_20 : i32 to vector<1x2xi32>
    %92 = arith.cmpi eq, %10, %91 : vector<1x2xi32>
    %93 = vector.shape_cast %92 : vector<1x2xi1> to vector<1x2xi1>
    %94 = vector.broadcast %93 : vector<1x2xi1> to vector<8x2xi1>
    %95 = vector.shape_cast %90 : vector<8x1xf32> to vector<8x1xf32>
    %96 = vector.broadcast %95 : vector<8x1xf32> to vector<8x2xf32>
    %97 = arith.select %94, %96, %81 : vector<8x2xi1>, vector<8x2xf32>
    %98 = arith.addf %55, %97 : vector<8x2xf32>
    %c2_i32 = arith.constant 2 : i32
    %cst_21 = arith.constant 0.899999976 : f32
    %99 = vector.broadcast %cst_21 : f32 to vector<8x32xf32>
    %100 = arith.mulf %99, %64 : vector<8x32xf32>
    %101 = arith.addf %100, %6 : vector<8x32xf32>
    %cst_22 = arith.constant 1.000000e+00 : f32
    %102 = vector.broadcast %cst_22 : f32 to vector<8x32xf32>
    %103 = arith.cmpf ogt, %101, %102 : vector<8x32xf32>
    %104 = arith.extui %103 : vector<8x32xi1> to vector<8x32xi32>
    %105 = arith.sitofp %104 : vector<8x32xi32> to vector<8x32xf32>
    %cst_23 = arith.constant 0.000000e+00 : f32
    %106 = vector.broadcast %cst_23 : f32 to vector<8x32xf32>
    %107 = arith.select %103, %106, %101 : vector<8x32xi1>, vector<8x32xf32>
    %cst_24 = arith.constant 0.000000e+00 : f32
    %108 = vector.broadcast %cst_24 : f32 to vector<8x2xf32>
    %109 = vector.broadcast %7 : vector<1x32xf32> to vector<8x32xf32>
    %110 = arith.mulf %105, %109 : vector<8x32xf32>
    %cst_25 = arith.constant dense<0.000000e+00> : vector<8xf32>
    %111 = vector.multi_reduction <add>, %110, %cst_25 [1] : vector<8x32xf32> to vector<8xf32>
    %112 = vector.shape_cast %111 : vector<8xf32> to vector<8x1xf32>
    %113 = vector.extract_strided_slice %9 {offsets = [0, 0], sizes = [1, 1], strides = [1, 1]} : vector<1x2xf32> to vector<1x1xf32>
    %114 = vector.broadcast %113 : vector<1x1xf32> to vector<8x1xf32>
    %115 = arith.cmpf ogt, %112, %114 : vector<8x1xf32>
    %116 = arith.extui %115 : vector<8x1xi1> to vector<8x1xi32>
    %117 = arith.sitofp %116 : vector<8x1xi32> to vector<8x1xf32>
    %c0_i32_26 = arith.constant 0 : i32
    %118 = vector.broadcast %c0_i32_26 : i32 to vector<1x2xi32>
    %119 = arith.cmpi eq, %10, %118 : vector<1x2xi32>
    %120 = vector.shape_cast %119 : vector<1x2xi1> to vector<1x2xi1>
    %121 = vector.broadcast %120 : vector<1x2xi1> to vector<8x2xi1>
    %122 = vector.shape_cast %117 : vector<8x1xf32> to vector<8x1xf32>
    %123 = vector.broadcast %122 : vector<8x1xf32> to vector<8x2xf32>
    %124 = arith.select %121, %123, %108 : vector<8x2xi1>, vector<8x2xf32>
    %125 = vector.broadcast %8 : vector<1x32xf32> to vector<8x32xf32>
    %126 = arith.mulf %105, %125 : vector<8x32xf32>
    %cst_27 = arith.constant dense<0.000000e+00> : vector<8xf32>
    %127 = vector.multi_reduction <add>, %126, %cst_27 [1] : vector<8x32xf32> to vector<8xf32>
    %128 = vector.shape_cast %127 : vector<8xf32> to vector<8x1xf32>
    %129 = vector.extract_strided_slice %9 {offsets = [0, 1], sizes = [1, 1], strides = [1, 1]} : vector<1x2xf32> to vector<1x1xf32>
    %130 = vector.broadcast %129 : vector<1x1xf32> to vector<8x1xf32>
    %131 = arith.cmpf ogt, %128, %130 : vector<8x1xf32>
    %132 = arith.extui %131 : vector<8x1xi1> to vector<8x1xi32>
    %133 = arith.sitofp %132 : vector<8x1xi32> to vector<8x1xf32>
    %c1_i32_28 = arith.constant 1 : i32
    %134 = vector.broadcast %c1_i32_28 : i32 to vector<1x2xi32>
    %135 = arith.cmpi eq, %10, %134 : vector<1x2xi32>
    %136 = vector.shape_cast %135 : vector<1x2xi1> to vector<1x2xi1>
    %137 = vector.broadcast %136 : vector<1x2xi1> to vector<8x2xi1>
    %138 = vector.shape_cast %133 : vector<8x1xf32> to vector<8x1xf32>
    %139 = vector.broadcast %138 : vector<8x1xf32> to vector<8x2xf32>
    %140 = arith.select %137, %139, %124 : vector<8x2xi1>, vector<8x2xf32>
    %141 = arith.addf %98, %140 : vector<8x2xf32>
    %c3_i32 = arith.constant 3 : i32
    %cst_29 = arith.constant 0.899999976 : f32
    %142 = vector.broadcast %cst_29 : f32 to vector<8x32xf32>
    %143 = arith.mulf %142, %107 : vector<8x32xf32>
    %144 = arith.addf %143, %6 : vector<8x32xf32>
    %cst_30 = arith.constant 1.000000e+00 : f32
    %145 = vector.broadcast %cst_30 : f32 to vector<8x32xf32>
    %146 = arith.cmpf ogt, %144, %145 : vector<8x32xf32>
    %147 = arith.extui %146 : vector<8x32xi1> to vector<8x32xi32>
    %148 = arith.sitofp %147 : vector<8x32xi32> to vector<8x32xf32>
    %cst_31 = arith.constant 0.000000e+00 : f32
    %149 = vector.broadcast %cst_31 : f32 to vector<8x32xf32>
    %150 = arith.select %146, %149, %144 : vector<8x32xi1>, vector<8x32xf32>
    %cst_32 = arith.constant 0.000000e+00 : f32
    %151 = vector.broadcast %cst_32 : f32 to vector<8x2xf32>
    %152 = vector.broadcast %7 : vector<1x32xf32> to vector<8x32xf32>
    %153 = arith.mulf %148, %152 : vector<8x32xf32>
    %cst_33 = arith.constant dense<0.000000e+00> : vector<8xf32>
    %154 = vector.multi_reduction <add>, %153, %cst_33 [1] : vector<8x32xf32> to vector<8xf32>
    %155 = vector.shape_cast %154 : vector<8xf32> to vector<8x1xf32>
    %156 = vector.extract_strided_slice %9 {offsets = [0, 0], sizes = [1, 1], strides = [1, 1]} : vector<1x2xf32> to vector<1x1xf32>
    %157 = vector.broadcast %156 : vector<1x1xf32> to vector<8x1xf32>
    %158 = arith.cmpf ogt, %155, %157 : vector<8x1xf32>
    %159 = arith.extui %158 : vector<8x1xi1> to vector<8x1xi32>
    %160 = arith.sitofp %159 : vector<8x1xi32> to vector<8x1xf32>
    %c0_i32_34 = arith.constant 0 : i32
    %161 = vector.broadcast %c0_i32_34 : i32 to vector<1x2xi32>
    %162 = arith.cmpi eq, %10, %161 : vector<1x2xi32>
    %163 = vector.shape_cast %162 : vector<1x2xi1> to vector<1x2xi1>
    %164 = vector.broadcast %163 : vector<1x2xi1> to vector<8x2xi1>
    %165 = vector.shape_cast %160 : vector<8x1xf32> to vector<8x1xf32>
    %166 = vector.broadcast %165 : vector<8x1xf32> to vector<8x2xf32>
    %167 = arith.select %164, %166, %151 : vector<8x2xi1>, vector<8x2xf32>
    %168 = vector.broadcast %8 : vector<1x32xf32> to vector<8x32xf32>
    %169 = arith.mulf %148, %168 : vector<8x32xf32>
    %cst_35 = arith.constant dense<0.000000e+00> : vector<8xf32>
    %170 = vector.multi_reduction <add>, %169, %cst_35 [1] : vector<8x32xf32> to vector<8xf32>
    %171 = vector.shape_cast %170 : vector<8xf32> to vector<8x1xf32>
    %172 = vector.extract_strided_slice %9 {offsets = [0, 1], sizes = [1, 1], strides = [1, 1]} : vector<1x2xf32> to vector<1x1xf32>
    %173 = vector.broadcast %172 : vector<1x1xf32> to vector<8x1xf32>
    %174 = arith.cmpf ogt, %171, %173 : vector<8x1xf32>
    %175 = arith.extui %174 : vector<8x1xi1> to vector<8x1xi32>
    %176 = arith.sitofp %175 : vector<8x1xi32> to vector<8x1xf32>
    %c1_i32_36 = arith.constant 1 : i32
    %177 = vector.broadcast %c1_i32_36 : i32 to vector<1x2xi32>
    %178 = arith.cmpi eq, %10, %177 : vector<1x2xi32>
    %179 = vector.shape_cast %178 : vector<1x2xi1> to vector<1x2xi1>
    %180 = vector.broadcast %179 : vector<1x2xi1> to vector<8x2xi1>
    %181 = vector.shape_cast %176 : vector<8x1xf32> to vector<8x1xf32>
    %182 = vector.broadcast %181 : vector<8x1xf32> to vector<8x2xf32>
    %183 = arith.select %180, %182, %167 : vector<8x2xi1>, vector<8x2xf32>
    %184 = arith.addf %141, %183 : vector<8x2xf32>
    %c4_i32 = arith.constant 4 : i32
    %cst_37 = arith.constant 0.899999976 : f32
    %185 = vector.broadcast %cst_37 : f32 to vector<8x32xf32>
    %186 = arith.mulf %185, %150 : vector<8x32xf32>
    %187 = arith.addf %186, %6 : vector<8x32xf32>
    %cst_38 = arith.constant 1.000000e+00 : f32
    %188 = vector.broadcast %cst_38 : f32 to vector<8x32xf32>
    %189 = arith.cmpf ogt, %187, %188 : vector<8x32xf32>
    %190 = arith.extui %189 : vector<8x32xi1> to vector<8x32xi32>
    %191 = arith.sitofp %190 : vector<8x32xi32> to vector<8x32xf32>
    %cst_39 = arith.constant 0.000000e+00 : f32
    %192 = vector.broadcast %cst_39 : f32 to vector<8x32xf32>
    %193 = arith.select %189, %192, %187 : vector<8x32xi1>, vector<8x32xf32>
    %cst_40 = arith.constant 0.000000e+00 : f32
    %194 = vector.broadcast %cst_40 : f32 to vector<8x2xf32>
    %195 = vector.broadcast %7 : vector<1x32xf32> to vector<8x32xf32>
    %196 = arith.mulf %191, %195 : vector<8x32xf32>
    %cst_41 = arith.constant dense<0.000000e+00> : vector<8xf32>
    %197 = vector.multi_reduction <add>, %196, %cst_41 [1] : vector<8x32xf32> to vector<8xf32>
    %198 = vector.shape_cast %197 : vector<8xf32> to vector<8x1xf32>
    %199 = vector.extract_strided_slice %9 {offsets = [0, 0], sizes = [1, 1], strides = [1, 1]} : vector<1x2xf32> to vector<1x1xf32>
    %200 = vector.broadcast %199 : vector<1x1xf32> to vector<8x1xf32>
    %201 = arith.cmpf ogt, %198, %200 : vector<8x1xf32>
    %202 = arith.extui %201 : vector<8x1xi1> to vector<8x1xi32>
    %203 = arith.sitofp %202 : vector<8x1xi32> to vector<8x1xf32>
    %c0_i32_42 = arith.constant 0 : i32
    %204 = vector.broadcast %c0_i32_42 : i32 to vector<1x2xi32>
    %205 = arith.cmpi eq, %10, %204 : vector<1x2xi32>
    %206 = vector.shape_cast %205 : vector<1x2xi1> to vector<1x2xi1>
    %207 = vector.broadcast %206 : vector<1x2xi1> to vector<8x2xi1>
    %208 = vector.shape_cast %203 : vector<8x1xf32> to vector<8x1xf32>
    %209 = vector.broadcast %208 : vector<8x1xf32> to vector<8x2xf32>
    %210 = arith.select %207, %209, %194 : vector<8x2xi1>, vector<8x2xf32>
    %211 = vector.broadcast %8 : vector<1x32xf32> to vector<8x32xf32>
    %212 = arith.mulf %191, %211 : vector<8x32xf32>
    %cst_43 = arith.constant dense<0.000000e+00> : vector<8xf32>
    %213 = vector.multi_reduction <add>, %212, %cst_43 [1] : vector<8x32xf32> to vector<8xf32>
    %214 = vector.shape_cast %213 : vector<8xf32> to vector<8x1xf32>
    %215 = vector.extract_strided_slice %9 {offsets = [0, 1], sizes = [1, 1], strides = [1, 1]} : vector<1x2xf32> to vector<1x1xf32>
    %216 = vector.broadcast %215 : vector<1x1xf32> to vector<8x1xf32>
    %217 = arith.cmpf ogt, %214, %216 : vector<8x1xf32>
    %218 = arith.extui %217 : vector<8x1xi1> to vector<8x1xi32>
    %219 = arith.sitofp %218 : vector<8x1xi32> to vector<8x1xf32>
    %c1_i32_44 = arith.constant 1 : i32
    %220 = vector.broadcast %c1_i32_44 : i32 to vector<1x2xi32>
    %221 = arith.cmpi eq, %10, %220 : vector<1x2xi32>
    %222 = vector.shape_cast %221 : vector<1x2xi1> to vector<1x2xi1>
    %223 = vector.broadcast %222 : vector<1x2xi1> to vector<8x2xi1>
    %224 = vector.shape_cast %219 : vector<8x1xf32> to vector<8x1xf32>
    %225 = vector.broadcast %224 : vector<8x1xf32> to vector<8x2xf32>
    %226 = arith.select %223, %225, %210 : vector<8x2xi1>, vector<8x2xf32>
    %227 = arith.addf %184, %226 : vector<8x2xf32>
    %c5_i32 = arith.constant 5 : i32
    %cst_45 = arith.constant 0.899999976 : f32
    %228 = vector.broadcast %cst_45 : f32 to vector<8x32xf32>
    %229 = arith.mulf %228, %193 : vector<8x32xf32>
    %230 = arith.addf %229, %6 : vector<8x32xf32>
    %cst_46 = arith.constant 1.000000e+00 : f32
    %231 = vector.broadcast %cst_46 : f32 to vector<8x32xf32>
    %232 = arith.cmpf ogt, %230, %231 : vector<8x32xf32>
    %233 = arith.extui %232 : vector<8x32xi1> to vector<8x32xi32>
    %234 = arith.sitofp %233 : vector<8x32xi32> to vector<8x32xf32>
    %cst_47 = arith.constant 0.000000e+00 : f32
    %235 = vector.broadcast %cst_47 : f32 to vector<8x32xf32>
    %236 = arith.select %232, %235, %230 : vector<8x32xi1>, vector<8x32xf32>
    %cst_48 = arith.constant 0.000000e+00 : f32
    %237 = vector.broadcast %cst_48 : f32 to vector<8x2xf32>
    %238 = vector.broadcast %7 : vector<1x32xf32> to vector<8x32xf32>
    %239 = arith.mulf %234, %238 : vector<8x32xf32>
    %cst_49 = arith.constant dense<0.000000e+00> : vector<8xf32>
    %240 = vector.multi_reduction <add>, %239, %cst_49 [1] : vector<8x32xf32> to vector<8xf32>
    %241 = vector.shape_cast %240 : vector<8xf32> to vector<8x1xf32>
    %242 = vector.extract_strided_slice %9 {offsets = [0, 0], sizes = [1, 1], strides = [1, 1]} : vector<1x2xf32> to vector<1x1xf32>
    %243 = vector.broadcast %242 : vector<1x1xf32> to vector<8x1xf32>
    %244 = arith.cmpf ogt, %241, %243 : vector<8x1xf32>
    %245 = arith.extui %244 : vector<8x1xi1> to vector<8x1xi32>
    %246 = arith.sitofp %245 : vector<8x1xi32> to vector<8x1xf32>
    %c0_i32_50 = arith.constant 0 : i32
    %247 = vector.broadcast %c0_i32_50 : i32 to vector<1x2xi32>
    %248 = arith.cmpi eq, %10, %247 : vector<1x2xi32>
    %249 = vector.shape_cast %248 : vector<1x2xi1> to vector<1x2xi1>
    %250 = vector.broadcast %249 : vector<1x2xi1> to vector<8x2xi1>
    %251 = vector.shape_cast %246 : vector<8x1xf32> to vector<8x1xf32>
    %252 = vector.broadcast %251 : vector<8x1xf32> to vector<8x2xf32>
    %253 = arith.select %250, %252, %237 : vector<8x2xi1>, vector<8x2xf32>
    %254 = vector.broadcast %8 : vector<1x32xf32> to vector<8x32xf32>
    %255 = arith.mulf %234, %254 : vector<8x32xf32>
    %cst_51 = arith.constant dense<0.000000e+00> : vector<8xf32>
    %256 = vector.multi_reduction <add>, %255, %cst_51 [1] : vector<8x32xf32> to vector<8xf32>
    %257 = vector.shape_cast %256 : vector<8xf32> to vector<8x1xf32>
    %258 = vector.extract_strided_slice %9 {offsets = [0, 1], sizes = [1, 1], strides = [1, 1]} : vector<1x2xf32> to vector<1x1xf32>
    %259 = vector.broadcast %258 : vector<1x1xf32> to vector<8x1xf32>
    %260 = arith.cmpf ogt, %257, %259 : vector<8x1xf32>
    %261 = arith.extui %260 : vector<8x1xi1> to vector<8x1xi32>
    %262 = arith.sitofp %261 : vector<8x1xi32> to vector<8x1xf32>
    %c1_i32_52 = arith.constant 1 : i32
    %263 = vector.broadcast %c1_i32_52 : i32 to vector<1x2xi32>
    %264 = arith.cmpi eq, %10, %263 : vector<1x2xi32>
    %265 = vector.shape_cast %264 : vector<1x2xi1> to vector<1x2xi1>
    %266 = vector.broadcast %265 : vector<1x2xi1> to vector<8x2xi1>
    %267 = vector.shape_cast %262 : vector<8x1xf32> to vector<8x1xf32>
    %268 = vector.broadcast %267 : vector<8x1xf32> to vector<8x2xf32>
    %269 = arith.select %266, %268, %253 : vector<8x2xi1>, vector<8x2xf32>
    %270 = arith.addf %227, %269 : vector<8x2xf32>
    %c6_i32 = arith.constant 6 : i32
    %cst_53 = arith.constant 0.899999976 : f32
    %271 = vector.broadcast %cst_53 : f32 to vector<8x32xf32>
    %272 = arith.mulf %271, %236 : vector<8x32xf32>
    %273 = arith.addf %272, %6 : vector<8x32xf32>
    %cst_54 = arith.constant 1.000000e+00 : f32
    %274 = vector.broadcast %cst_54 : f32 to vector<8x32xf32>
    %275 = arith.cmpf ogt, %273, %274 : vector<8x32xf32>
    %276 = arith.extui %275 : vector<8x32xi1> to vector<8x32xi32>
    %277 = arith.sitofp %276 : vector<8x32xi32> to vector<8x32xf32>
    %cst_55 = arith.constant 0.000000e+00 : f32
    %278 = vector.broadcast %cst_55 : f32 to vector<8x32xf32>
    %279 = arith.select %275, %278, %273 : vector<8x32xi1>, vector<8x32xf32>
    %cst_56 = arith.constant 0.000000e+00 : f32
    %280 = vector.broadcast %cst_56 : f32 to vector<8x2xf32>
    %281 = vector.broadcast %7 : vector<1x32xf32> to vector<8x32xf32>
    %282 = arith.mulf %277, %281 : vector<8x32xf32>
    %cst_57 = arith.constant dense<0.000000e+00> : vector<8xf32>
    %283 = vector.multi_reduction <add>, %282, %cst_57 [1] : vector<8x32xf32> to vector<8xf32>
    %284 = vector.shape_cast %283 : vector<8xf32> to vector<8x1xf32>
    %285 = vector.extract_strided_slice %9 {offsets = [0, 0], sizes = [1, 1], strides = [1, 1]} : vector<1x2xf32> to vector<1x1xf32>
    %286 = vector.broadcast %285 : vector<1x1xf32> to vector<8x1xf32>
    %287 = arith.cmpf ogt, %284, %286 : vector<8x1xf32>
    %288 = arith.extui %287 : vector<8x1xi1> to vector<8x1xi32>
    %289 = arith.sitofp %288 : vector<8x1xi32> to vector<8x1xf32>
    %c0_i32_58 = arith.constant 0 : i32
    %290 = vector.broadcast %c0_i32_58 : i32 to vector<1x2xi32>
    %291 = arith.cmpi eq, %10, %290 : vector<1x2xi32>
    %292 = vector.shape_cast %291 : vector<1x2xi1> to vector<1x2xi1>
    %293 = vector.broadcast %292 : vector<1x2xi1> to vector<8x2xi1>
    %294 = vector.shape_cast %289 : vector<8x1xf32> to vector<8x1xf32>
    %295 = vector.broadcast %294 : vector<8x1xf32> to vector<8x2xf32>
    %296 = arith.select %293, %295, %280 : vector<8x2xi1>, vector<8x2xf32>
    %297 = vector.broadcast %8 : vector<1x32xf32> to vector<8x32xf32>
    %298 = arith.mulf %277, %297 : vector<8x32xf32>
    %cst_59 = arith.constant dense<0.000000e+00> : vector<8xf32>
    %299 = vector.multi_reduction <add>, %298, %cst_59 [1] : vector<8x32xf32> to vector<8xf32>
    %300 = vector.shape_cast %299 : vector<8xf32> to vector<8x1xf32>
    %301 = vector.extract_strided_slice %9 {offsets = [0, 1], sizes = [1, 1], strides = [1, 1]} : vector<1x2xf32> to vector<1x1xf32>
    %302 = vector.broadcast %301 : vector<1x1xf32> to vector<8x1xf32>
    %303 = arith.cmpf ogt, %300, %302 : vector<8x1xf32>
    %304 = arith.extui %303 : vector<8x1xi1> to vector<8x1xi32>
    %305 = arith.sitofp %304 : vector<8x1xi32> to vector<8x1xf32>
    %c1_i32_60 = arith.constant 1 : i32
    %306 = vector.broadcast %c1_i32_60 : i32 to vector<1x2xi32>
    %307 = arith.cmpi eq, %10, %306 : vector<1x2xi32>
    %308 = vector.shape_cast %307 : vector<1x2xi1> to vector<1x2xi1>
    %309 = vector.broadcast %308 : vector<1x2xi1> to vector<8x2xi1>
    %310 = vector.shape_cast %305 : vector<8x1xf32> to vector<8x1xf32>
    %311 = vector.broadcast %310 : vector<8x1xf32> to vector<8x2xf32>
    %312 = arith.select %309, %311, %296 : vector<8x2xi1>, vector<8x2xf32>
    %313 = arith.addf %270, %312 : vector<8x2xf32>
    %c7_i32 = arith.constant 7 : i32
    %cst_61 = arith.constant 0.899999976 : f32
    %314 = vector.broadcast %cst_61 : f32 to vector<8x32xf32>
    %315 = arith.mulf %314, %279 : vector<8x32xf32>
    %316 = arith.addf %315, %6 : vector<8x32xf32>
    %cst_62 = arith.constant 1.000000e+00 : f32
    %317 = vector.broadcast %cst_62 : f32 to vector<8x32xf32>
    %318 = arith.cmpf ogt, %316, %317 : vector<8x32xf32>
    %319 = arith.extui %318 : vector<8x32xi1> to vector<8x32xi32>
    %320 = arith.sitofp %319 : vector<8x32xi32> to vector<8x32xf32>
    %cst_63 = arith.constant 0.000000e+00 : f32
    %321 = vector.broadcast %cst_63 : f32 to vector<8x32xf32>
    %322 = arith.select %318, %321, %316 : vector<8x32xi1>, vector<8x32xf32>
    %cst_64 = arith.constant 0.000000e+00 : f32
    %323 = vector.broadcast %cst_64 : f32 to vector<8x2xf32>
    %324 = vector.broadcast %7 : vector<1x32xf32> to vector<8x32xf32>
    %325 = arith.mulf %320, %324 : vector<8x32xf32>
    %cst_65 = arith.constant dense<0.000000e+00> : vector<8xf32>
    %326 = vector.multi_reduction <add>, %325, %cst_65 [1] : vector<8x32xf32> to vector<8xf32>
    %327 = vector.shape_cast %326 : vector<8xf32> to vector<8x1xf32>
    %328 = vector.extract_strided_slice %9 {offsets = [0, 0], sizes = [1, 1], strides = [1, 1]} : vector<1x2xf32> to vector<1x1xf32>
    %329 = vector.broadcast %328 : vector<1x1xf32> to vector<8x1xf32>
    %330 = arith.cmpf ogt, %327, %329 : vector<8x1xf32>
    %331 = arith.extui %330 : vector<8x1xi1> to vector<8x1xi32>
    %332 = arith.sitofp %331 : vector<8x1xi32> to vector<8x1xf32>
    %c0_i32_66 = arith.constant 0 : i32
    %333 = vector.broadcast %c0_i32_66 : i32 to vector<1x2xi32>
    %334 = arith.cmpi eq, %10, %333 : vector<1x2xi32>
    %335 = vector.shape_cast %334 : vector<1x2xi1> to vector<1x2xi1>
    %336 = vector.broadcast %335 : vector<1x2xi1> to vector<8x2xi1>
    %337 = vector.shape_cast %332 : vector<8x1xf32> to vector<8x1xf32>
    %338 = vector.broadcast %337 : vector<8x1xf32> to vector<8x2xf32>
    %339 = arith.select %336, %338, %323 : vector<8x2xi1>, vector<8x2xf32>
    %340 = vector.broadcast %8 : vector<1x32xf32> to vector<8x32xf32>
    %341 = arith.mulf %320, %340 : vector<8x32xf32>
    %cst_67 = arith.constant dense<0.000000e+00> : vector<8xf32>
    %342 = vector.multi_reduction <add>, %341, %cst_67 [1] : vector<8x32xf32> to vector<8xf32>
    %343 = vector.shape_cast %342 : vector<8xf32> to vector<8x1xf32>
    %344 = vector.extract_strided_slice %9 {offsets = [0, 1], sizes = [1, 1], strides = [1, 1]} : vector<1x2xf32> to vector<1x1xf32>
    %345 = vector.broadcast %344 : vector<1x1xf32> to vector<8x1xf32>
    %346 = arith.cmpf ogt, %343, %345 : vector<8x1xf32>
    %347 = arith.extui %346 : vector<8x1xi1> to vector<8x1xi32>
    %348 = arith.sitofp %347 : vector<8x1xi32> to vector<8x1xf32>
    %c1_i32_68 = arith.constant 1 : i32
    %349 = vector.broadcast %c1_i32_68 : i32 to vector<1x2xi32>
    %350 = arith.cmpi eq, %10, %349 : vector<1x2xi32>
    %351 = vector.shape_cast %350 : vector<1x2xi1> to vector<1x2xi1>
    %352 = vector.broadcast %351 : vector<1x2xi1> to vector<8x2xi1>
    %353 = vector.shape_cast %348 : vector<8x1xf32> to vector<8x1xf32>
    %354 = vector.broadcast %353 : vector<8x1xf32> to vector<8x2xf32>
    %355 = arith.select %352, %354, %339 : vector<8x2xi1>, vector<8x2xf32>
    %356 = arith.addf %313, %355 : vector<8x2xf32>
    %c8_i32 = arith.constant 8 : i32
    %cst_69 = arith.constant 0.899999976 : f32
    %357 = vector.broadcast %cst_69 : f32 to vector<8x32xf32>
    %358 = arith.mulf %357, %322 : vector<8x32xf32>
    %359 = arith.addf %358, %6 : vector<8x32xf32>
    %cst_70 = arith.constant 1.000000e+00 : f32
    %360 = vector.broadcast %cst_70 : f32 to vector<8x32xf32>
    %361 = arith.cmpf ogt, %359, %360 : vector<8x32xf32>
    %362 = arith.extui %361 : vector<8x32xi1> to vector<8x32xi32>
    %363 = arith.sitofp %362 : vector<8x32xi32> to vector<8x32xf32>
    %cst_71 = arith.constant 0.000000e+00 : f32
    %364 = vector.broadcast %cst_71 : f32 to vector<8x32xf32>
    %365 = arith.select %361, %364, %359 : vector<8x32xi1>, vector<8x32xf32>
    %cst_72 = arith.constant 0.000000e+00 : f32
    %366 = vector.broadcast %cst_72 : f32 to vector<8x2xf32>
    %367 = vector.broadcast %7 : vector<1x32xf32> to vector<8x32xf32>
    %368 = arith.mulf %363, %367 : vector<8x32xf32>
    %cst_73 = arith.constant dense<0.000000e+00> : vector<8xf32>
    %369 = vector.multi_reduction <add>, %368, %cst_73 [1] : vector<8x32xf32> to vector<8xf32>
    %370 = vector.shape_cast %369 : vector<8xf32> to vector<8x1xf32>
    %371 = vector.extract_strided_slice %9 {offsets = [0, 0], sizes = [1, 1], strides = [1, 1]} : vector<1x2xf32> to vector<1x1xf32>
    %372 = vector.broadcast %371 : vector<1x1xf32> to vector<8x1xf32>
    %373 = arith.cmpf ogt, %370, %372 : vector<8x1xf32>
    %374 = arith.extui %373 : vector<8x1xi1> to vector<8x1xi32>
    %375 = arith.sitofp %374 : vector<8x1xi32> to vector<8x1xf32>
    %c0_i32_74 = arith.constant 0 : i32
    %376 = vector.broadcast %c0_i32_74 : i32 to vector<1x2xi32>
    %377 = arith.cmpi eq, %10, %376 : vector<1x2xi32>
    %378 = vector.shape_cast %377 : vector<1x2xi1> to vector<1x2xi1>
    %379 = vector.broadcast %378 : vector<1x2xi1> to vector<8x2xi1>
    %380 = vector.shape_cast %375 : vector<8x1xf32> to vector<8x1xf32>
    %381 = vector.broadcast %380 : vector<8x1xf32> to vector<8x2xf32>
    %382 = arith.select %379, %381, %366 : vector<8x2xi1>, vector<8x2xf32>
    %383 = vector.broadcast %8 : vector<1x32xf32> to vector<8x32xf32>
    %384 = arith.mulf %363, %383 : vector<8x32xf32>
    %cst_75 = arith.constant dense<0.000000e+00> : vector<8xf32>
    %385 = vector.multi_reduction <add>, %384, %cst_75 [1] : vector<8x32xf32> to vector<8xf32>
    %386 = vector.shape_cast %385 : vector<8xf32> to vector<8x1xf32>
    %387 = vector.extract_strided_slice %9 {offsets = [0, 1], sizes = [1, 1], strides = [1, 1]} : vector<1x2xf32> to vector<1x1xf32>
    %388 = vector.broadcast %387 : vector<1x1xf32> to vector<8x1xf32>
    %389 = arith.cmpf ogt, %386, %388 : vector<8x1xf32>
    %390 = arith.extui %389 : vector<8x1xi1> to vector<8x1xi32>
    %391 = arith.sitofp %390 : vector<8x1xi32> to vector<8x1xf32>
    %c1_i32_76 = arith.constant 1 : i32
    %392 = vector.broadcast %c1_i32_76 : i32 to vector<1x2xi32>
    %393 = arith.cmpi eq, %10, %392 : vector<1x2xi32>
    %394 = vector.shape_cast %393 : vector<1x2xi1> to vector<1x2xi1>
    %395 = vector.broadcast %394 : vector<1x2xi1> to vector<8x2xi1>
    %396 = vector.shape_cast %391 : vector<8x1xf32> to vector<8x1xf32>
    %397 = vector.broadcast %396 : vector<8x1xf32> to vector<8x2xf32>
    %398 = arith.select %395, %397, %382 : vector<8x2xi1>, vector<8x2xf32>
    %399 = arith.addf %356, %398 : vector<8x2xf32>
    %c9_i32 = arith.constant 9 : i32
    %cst_77 = arith.constant 0.899999976 : f32
    %400 = vector.broadcast %cst_77 : f32 to vector<8x32xf32>
    %401 = arith.mulf %400, %365 : vector<8x32xf32>
    %402 = arith.addf %401, %6 : vector<8x32xf32>
    %cst_78 = arith.constant 1.000000e+00 : f32
    %403 = vector.broadcast %cst_78 : f32 to vector<8x32xf32>
    %404 = arith.cmpf ogt, %402, %403 : vector<8x32xf32>
    %405 = arith.extui %404 : vector<8x32xi1> to vector<8x32xi32>
    %406 = arith.sitofp %405 : vector<8x32xi32> to vector<8x32xf32>
    %cst_79 = arith.constant 0.000000e+00 : f32
    %407 = vector.broadcast %cst_79 : f32 to vector<8x32xf32>
    %408 = arith.select %404, %407, %402 : vector<8x32xi1>, vector<8x32xf32>
    %cst_80 = arith.constant 0.000000e+00 : f32
    %409 = vector.broadcast %cst_80 : f32 to vector<8x2xf32>
    %410 = vector.broadcast %7 : vector<1x32xf32> to vector<8x32xf32>
    %411 = arith.mulf %406, %410 : vector<8x32xf32>
    %cst_81 = arith.constant dense<0.000000e+00> : vector<8xf32>
    %412 = vector.multi_reduction <add>, %411, %cst_81 [1] : vector<8x32xf32> to vector<8xf32>
    %413 = vector.shape_cast %412 : vector<8xf32> to vector<8x1xf32>
    %414 = vector.extract_strided_slice %9 {offsets = [0, 0], sizes = [1, 1], strides = [1, 1]} : vector<1x2xf32> to vector<1x1xf32>
    %415 = vector.broadcast %414 : vector<1x1xf32> to vector<8x1xf32>
    %416 = arith.cmpf ogt, %413, %415 : vector<8x1xf32>
    %417 = arith.extui %416 : vector<8x1xi1> to vector<8x1xi32>
    %418 = arith.sitofp %417 : vector<8x1xi32> to vector<8x1xf32>
    %c0_i32_82 = arith.constant 0 : i32
    %419 = vector.broadcast %c0_i32_82 : i32 to vector<1x2xi32>
    %420 = arith.cmpi eq, %10, %419 : vector<1x2xi32>
    %421 = vector.shape_cast %420 : vector<1x2xi1> to vector<1x2xi1>
    %422 = vector.broadcast %421 : vector<1x2xi1> to vector<8x2xi1>
    %423 = vector.shape_cast %418 : vector<8x1xf32> to vector<8x1xf32>
    %424 = vector.broadcast %423 : vector<8x1xf32> to vector<8x2xf32>
    %425 = arith.select %422, %424, %409 : vector<8x2xi1>, vector<8x2xf32>
    %426 = vector.broadcast %8 : vector<1x32xf32> to vector<8x32xf32>
    %427 = arith.mulf %406, %426 : vector<8x32xf32>
    %cst_83 = arith.constant dense<0.000000e+00> : vector<8xf32>
    %428 = vector.multi_reduction <add>, %427, %cst_83 [1] : vector<8x32xf32> to vector<8xf32>
    %429 = vector.shape_cast %428 : vector<8xf32> to vector<8x1xf32>
    %430 = vector.extract_strided_slice %9 {offsets = [0, 1], sizes = [1, 1], strides = [1, 1]} : vector<1x2xf32> to vector<1x1xf32>
    %431 = vector.broadcast %430 : vector<1x1xf32> to vector<8x1xf32>
    %432 = arith.cmpf ogt, %429, %431 : vector<8x1xf32>
    %433 = arith.extui %432 : vector<8x1xi1> to vector<8x1xi32>
    %434 = arith.sitofp %433 : vector<8x1xi32> to vector<8x1xf32>
    %c1_i32_84 = arith.constant 1 : i32
    %435 = vector.broadcast %c1_i32_84 : i32 to vector<1x2xi32>
    %436 = arith.cmpi eq, %10, %435 : vector<1x2xi32>
    %437 = vector.shape_cast %436 : vector<1x2xi1> to vector<1x2xi1>
    %438 = vector.broadcast %437 : vector<1x2xi1> to vector<8x2xi1>
    %439 = vector.shape_cast %434 : vector<8x1xf32> to vector<8x1xf32>
    %440 = vector.broadcast %439 : vector<8x1xf32> to vector<8x2xf32>
    %441 = arith.select %438, %440, %425 : vector<8x2xi1>, vector<8x2xf32>
    %442 = arith.addf %399, %441 : vector<8x2xf32>
    %c10_i32 = arith.constant 10 : i32
    %cst_85 = arith.constant 0.899999976 : f32
    %443 = vector.broadcast %cst_85 : f32 to vector<8x32xf32>
    %444 = arith.mulf %443, %408 : vector<8x32xf32>
    %445 = arith.addf %444, %6 : vector<8x32xf32>
    %cst_86 = arith.constant 1.000000e+00 : f32
    %446 = vector.broadcast %cst_86 : f32 to vector<8x32xf32>
    %447 = arith.cmpf ogt, %445, %446 : vector<8x32xf32>
    %448 = arith.extui %447 : vector<8x32xi1> to vector<8x32xi32>
    %449 = arith.sitofp %448 : vector<8x32xi32> to vector<8x32xf32>
    %cst_87 = arith.constant 0.000000e+00 : f32
    %450 = vector.broadcast %cst_87 : f32 to vector<8x32xf32>
    %451 = arith.select %447, %450, %445 : vector<8x32xi1>, vector<8x32xf32>
    %cst_88 = arith.constant 0.000000e+00 : f32
    %452 = vector.broadcast %cst_88 : f32 to vector<8x2xf32>
    %453 = vector.broadcast %7 : vector<1x32xf32> to vector<8x32xf32>
    %454 = arith.mulf %449, %453 : vector<8x32xf32>
    %cst_89 = arith.constant dense<0.000000e+00> : vector<8xf32>
    %455 = vector.multi_reduction <add>, %454, %cst_89 [1] : vector<8x32xf32> to vector<8xf32>
    %456 = vector.shape_cast %455 : vector<8xf32> to vector<8x1xf32>
    %457 = vector.extract_strided_slice %9 {offsets = [0, 0], sizes = [1, 1], strides = [1, 1]} : vector<1x2xf32> to vector<1x1xf32>
    %458 = vector.broadcast %457 : vector<1x1xf32> to vector<8x1xf32>
    %459 = arith.cmpf ogt, %456, %458 : vector<8x1xf32>
    %460 = arith.extui %459 : vector<8x1xi1> to vector<8x1xi32>
    %461 = arith.sitofp %460 : vector<8x1xi32> to vector<8x1xf32>
    %c0_i32_90 = arith.constant 0 : i32
    %462 = vector.broadcast %c0_i32_90 : i32 to vector<1x2xi32>
    %463 = arith.cmpi eq, %10, %462 : vector<1x2xi32>
    %464 = vector.shape_cast %463 : vector<1x2xi1> to vector<1x2xi1>
    %465 = vector.broadcast %464 : vector<1x2xi1> to vector<8x2xi1>
    %466 = vector.shape_cast %461 : vector<8x1xf32> to vector<8x1xf32>
    %467 = vector.broadcast %466 : vector<8x1xf32> to vector<8x2xf32>
    %468 = arith.select %465, %467, %452 : vector<8x2xi1>, vector<8x2xf32>
    %469 = vector.broadcast %8 : vector<1x32xf32> to vector<8x32xf32>
    %470 = arith.mulf %449, %469 : vector<8x32xf32>
    %cst_91 = arith.constant dense<0.000000e+00> : vector<8xf32>
    %471 = vector.multi_reduction <add>, %470, %cst_91 [1] : vector<8x32xf32> to vector<8xf32>
    %472 = vector.shape_cast %471 : vector<8xf32> to vector<8x1xf32>
    %473 = vector.extract_strided_slice %9 {offsets = [0, 1], sizes = [1, 1], strides = [1, 1]} : vector<1x2xf32> to vector<1x1xf32>
    %474 = vector.broadcast %473 : vector<1x1xf32> to vector<8x1xf32>
    %475 = arith.cmpf ogt, %472, %474 : vector<8x1xf32>
    %476 = arith.extui %475 : vector<8x1xi1> to vector<8x1xi32>
    %477 = arith.sitofp %476 : vector<8x1xi32> to vector<8x1xf32>
    %c1_i32_92 = arith.constant 1 : i32
    %478 = vector.broadcast %c1_i32_92 : i32 to vector<1x2xi32>
    %479 = arith.cmpi eq, %10, %478 : vector<1x2xi32>
    %480 = vector.shape_cast %479 : vector<1x2xi1> to vector<1x2xi1>
    %481 = vector.broadcast %480 : vector<1x2xi1> to vector<8x2xi1>
    %482 = vector.shape_cast %477 : vector<8x1xf32> to vector<8x1xf32>
    %483 = vector.broadcast %482 : vector<8x1xf32> to vector<8x2xf32>
    %484 = arith.select %481, %483, %468 : vector<8x2xi1>, vector<8x2xf32>
    %485 = arith.addf %442, %484 : vector<8x2xf32>
    %c11_i32 = arith.constant 11 : i32
    %cst_93 = arith.constant 0.899999976 : f32
    %486 = vector.broadcast %cst_93 : f32 to vector<8x32xf32>
    %487 = arith.mulf %486, %451 : vector<8x32xf32>
    %488 = arith.addf %487, %6 : vector<8x32xf32>
    %cst_94 = arith.constant 1.000000e+00 : f32
    %489 = vector.broadcast %cst_94 : f32 to vector<8x32xf32>
    %490 = arith.cmpf ogt, %488, %489 : vector<8x32xf32>
    %491 = arith.extui %490 : vector<8x32xi1> to vector<8x32xi32>
    %492 = arith.sitofp %491 : vector<8x32xi32> to vector<8x32xf32>
    %cst_95 = arith.constant 0.000000e+00 : f32
    %493 = vector.broadcast %cst_95 : f32 to vector<8x32xf32>
    %494 = arith.select %490, %493, %488 : vector<8x32xi1>, vector<8x32xf32>
    %cst_96 = arith.constant 0.000000e+00 : f32
    %495 = vector.broadcast %cst_96 : f32 to vector<8x2xf32>
    %496 = vector.broadcast %7 : vector<1x32xf32> to vector<8x32xf32>
    %497 = arith.mulf %492, %496 : vector<8x32xf32>
    %cst_97 = arith.constant dense<0.000000e+00> : vector<8xf32>
    %498 = vector.multi_reduction <add>, %497, %cst_97 [1] : vector<8x32xf32> to vector<8xf32>
    %499 = vector.shape_cast %498 : vector<8xf32> to vector<8x1xf32>
    %500 = vector.extract_strided_slice %9 {offsets = [0, 0], sizes = [1, 1], strides = [1, 1]} : vector<1x2xf32> to vector<1x1xf32>
    %501 = vector.broadcast %500 : vector<1x1xf32> to vector<8x1xf32>
    %502 = arith.cmpf ogt, %499, %501 : vector<8x1xf32>
    %503 = arith.extui %502 : vector<8x1xi1> to vector<8x1xi32>
    %504 = arith.sitofp %503 : vector<8x1xi32> to vector<8x1xf32>
    %c0_i32_98 = arith.constant 0 : i32
    %505 = vector.broadcast %c0_i32_98 : i32 to vector<1x2xi32>
    %506 = arith.cmpi eq, %10, %505 : vector<1x2xi32>
    %507 = vector.shape_cast %506 : vector<1x2xi1> to vector<1x2xi1>
    %508 = vector.broadcast %507 : vector<1x2xi1> to vector<8x2xi1>
    %509 = vector.shape_cast %504 : vector<8x1xf32> to vector<8x1xf32>
    %510 = vector.broadcast %509 : vector<8x1xf32> to vector<8x2xf32>
    %511 = arith.select %508, %510, %495 : vector<8x2xi1>, vector<8x2xf32>
    %512 = vector.broadcast %8 : vector<1x32xf32> to vector<8x32xf32>
    %513 = arith.mulf %492, %512 : vector<8x32xf32>
    %cst_99 = arith.constant dense<0.000000e+00> : vector<8xf32>
    %514 = vector.multi_reduction <add>, %513, %cst_99 [1] : vector<8x32xf32> to vector<8xf32>
    %515 = vector.shape_cast %514 : vector<8xf32> to vector<8x1xf32>
    %516 = vector.extract_strided_slice %9 {offsets = [0, 1], sizes = [1, 1], strides = [1, 1]} : vector<1x2xf32> to vector<1x1xf32>
    %517 = vector.broadcast %516 : vector<1x1xf32> to vector<8x1xf32>
    %518 = arith.cmpf ogt, %515, %517 : vector<8x1xf32>
    %519 = arith.extui %518 : vector<8x1xi1> to vector<8x1xi32>
    %520 = arith.sitofp %519 : vector<8x1xi32> to vector<8x1xf32>
    %c1_i32_100 = arith.constant 1 : i32
    %521 = vector.broadcast %c1_i32_100 : i32 to vector<1x2xi32>
    %522 = arith.cmpi eq, %10, %521 : vector<1x2xi32>
    %523 = vector.shape_cast %522 : vector<1x2xi1> to vector<1x2xi1>
    %524 = vector.broadcast %523 : vector<1x2xi1> to vector<8x2xi1>
    %525 = vector.shape_cast %520 : vector<8x1xf32> to vector<8x1xf32>
    %526 = vector.broadcast %525 : vector<8x1xf32> to vector<8x2xf32>
    %527 = arith.select %524, %526, %511 : vector<8x2xi1>, vector<8x2xf32>
    %528 = arith.addf %485, %527 : vector<8x2xf32>
    %c12_i32 = arith.constant 12 : i32
    %cst_101 = arith.constant 0.899999976 : f32
    %529 = vector.broadcast %cst_101 : f32 to vector<8x32xf32>
    %530 = arith.mulf %529, %494 : vector<8x32xf32>
    %531 = arith.addf %530, %6 : vector<8x32xf32>
    %cst_102 = arith.constant 1.000000e+00 : f32
    %532 = vector.broadcast %cst_102 : f32 to vector<8x32xf32>
    %533 = arith.cmpf ogt, %531, %532 : vector<8x32xf32>
    %534 = arith.extui %533 : vector<8x32xi1> to vector<8x32xi32>
    %535 = arith.sitofp %534 : vector<8x32xi32> to vector<8x32xf32>
    %cst_103 = arith.constant 0.000000e+00 : f32
    %536 = vector.broadcast %cst_103 : f32 to vector<8x32xf32>
    %537 = arith.select %533, %536, %531 : vector<8x32xi1>, vector<8x32xf32>
    %cst_104 = arith.constant 0.000000e+00 : f32
    %538 = vector.broadcast %cst_104 : f32 to vector<8x2xf32>
    %539 = vector.broadcast %7 : vector<1x32xf32> to vector<8x32xf32>
    %540 = arith.mulf %535, %539 : vector<8x32xf32>
    %cst_105 = arith.constant dense<0.000000e+00> : vector<8xf32>
    %541 = vector.multi_reduction <add>, %540, %cst_105 [1] : vector<8x32xf32> to vector<8xf32>
    %542 = vector.shape_cast %541 : vector<8xf32> to vector<8x1xf32>
    %543 = vector.extract_strided_slice %9 {offsets = [0, 0], sizes = [1, 1], strides = [1, 1]} : vector<1x2xf32> to vector<1x1xf32>
    %544 = vector.broadcast %543 : vector<1x1xf32> to vector<8x1xf32>
    %545 = arith.cmpf ogt, %542, %544 : vector<8x1xf32>
    %546 = arith.extui %545 : vector<8x1xi1> to vector<8x1xi32>
    %547 = arith.sitofp %546 : vector<8x1xi32> to vector<8x1xf32>
    %c0_i32_106 = arith.constant 0 : i32
    %548 = vector.broadcast %c0_i32_106 : i32 to vector<1x2xi32>
    %549 = arith.cmpi eq, %10, %548 : vector<1x2xi32>
    %550 = vector.shape_cast %549 : vector<1x2xi1> to vector<1x2xi1>
    %551 = vector.broadcast %550 : vector<1x2xi1> to vector<8x2xi1>
    %552 = vector.shape_cast %547 : vector<8x1xf32> to vector<8x1xf32>
    %553 = vector.broadcast %552 : vector<8x1xf32> to vector<8x2xf32>
    %554 = arith.select %551, %553, %538 : vector<8x2xi1>, vector<8x2xf32>
    %555 = vector.broadcast %8 : vector<1x32xf32> to vector<8x32xf32>
    %556 = arith.mulf %535, %555 : vector<8x32xf32>
    %cst_107 = arith.constant dense<0.000000e+00> : vector<8xf32>
    %557 = vector.multi_reduction <add>, %556, %cst_107 [1] : vector<8x32xf32> to vector<8xf32>
    %558 = vector.shape_cast %557 : vector<8xf32> to vector<8x1xf32>
    %559 = vector.extract_strided_slice %9 {offsets = [0, 1], sizes = [1, 1], strides = [1, 1]} : vector<1x2xf32> to vector<1x1xf32>
    %560 = vector.broadcast %559 : vector<1x1xf32> to vector<8x1xf32>
    %561 = arith.cmpf ogt, %558, %560 : vector<8x1xf32>
    %562 = arith.extui %561 : vector<8x1xi1> to vector<8x1xi32>
    %563 = arith.sitofp %562 : vector<8x1xi32> to vector<8x1xf32>
    %c1_i32_108 = arith.constant 1 : i32
    %564 = vector.broadcast %c1_i32_108 : i32 to vector<1x2xi32>
    %565 = arith.cmpi eq, %10, %564 : vector<1x2xi32>
    %566 = vector.shape_cast %565 : vector<1x2xi1> to vector<1x2xi1>
    %567 = vector.broadcast %566 : vector<1x2xi1> to vector<8x2xi1>
    %568 = vector.shape_cast %563 : vector<8x1xf32> to vector<8x1xf32>
    %569 = vector.broadcast %568 : vector<8x1xf32> to vector<8x2xf32>
    %570 = arith.select %567, %569, %554 : vector<8x2xi1>, vector<8x2xf32>
    %571 = arith.addf %528, %570 : vector<8x2xf32>
    %c13_i32 = arith.constant 13 : i32
    %cst_109 = arith.constant 0.899999976 : f32
    %572 = vector.broadcast %cst_109 : f32 to vector<8x32xf32>
    %573 = arith.mulf %572, %537 : vector<8x32xf32>
    %574 = arith.addf %573, %6 : vector<8x32xf32>
    %cst_110 = arith.constant 1.000000e+00 : f32
    %575 = vector.broadcast %cst_110 : f32 to vector<8x32xf32>
    %576 = arith.cmpf ogt, %574, %575 : vector<8x32xf32>
    %577 = arith.extui %576 : vector<8x32xi1> to vector<8x32xi32>
    %578 = arith.sitofp %577 : vector<8x32xi32> to vector<8x32xf32>
    %cst_111 = arith.constant 0.000000e+00 : f32
    %579 = vector.broadcast %cst_111 : f32 to vector<8x32xf32>
    %580 = arith.select %576, %579, %574 : vector<8x32xi1>, vector<8x32xf32>
    %cst_112 = arith.constant 0.000000e+00 : f32
    %581 = vector.broadcast %cst_112 : f32 to vector<8x2xf32>
    %582 = vector.broadcast %7 : vector<1x32xf32> to vector<8x32xf32>
    %583 = arith.mulf %578, %582 : vector<8x32xf32>
    %cst_113 = arith.constant dense<0.000000e+00> : vector<8xf32>
    %584 = vector.multi_reduction <add>, %583, %cst_113 [1] : vector<8x32xf32> to vector<8xf32>
    %585 = vector.shape_cast %584 : vector<8xf32> to vector<8x1xf32>
    %586 = vector.extract_strided_slice %9 {offsets = [0, 0], sizes = [1, 1], strides = [1, 1]} : vector<1x2xf32> to vector<1x1xf32>
    %587 = vector.broadcast %586 : vector<1x1xf32> to vector<8x1xf32>
    %588 = arith.cmpf ogt, %585, %587 : vector<8x1xf32>
    %589 = arith.extui %588 : vector<8x1xi1> to vector<8x1xi32>
    %590 = arith.sitofp %589 : vector<8x1xi32> to vector<8x1xf32>
    %c0_i32_114 = arith.constant 0 : i32
    %591 = vector.broadcast %c0_i32_114 : i32 to vector<1x2xi32>
    %592 = arith.cmpi eq, %10, %591 : vector<1x2xi32>
    %593 = vector.shape_cast %592 : vector<1x2xi1> to vector<1x2xi1>
    %594 = vector.broadcast %593 : vector<1x2xi1> to vector<8x2xi1>
    %595 = vector.shape_cast %590 : vector<8x1xf32> to vector<8x1xf32>
    %596 = vector.broadcast %595 : vector<8x1xf32> to vector<8x2xf32>
    %597 = arith.select %594, %596, %581 : vector<8x2xi1>, vector<8x2xf32>
    %598 = vector.broadcast %8 : vector<1x32xf32> to vector<8x32xf32>
    %599 = arith.mulf %578, %598 : vector<8x32xf32>
    %cst_115 = arith.constant dense<0.000000e+00> : vector<8xf32>
    %600 = vector.multi_reduction <add>, %599, %cst_115 [1] : vector<8x32xf32> to vector<8xf32>
    %601 = vector.shape_cast %600 : vector<8xf32> to vector<8x1xf32>
    %602 = vector.extract_strided_slice %9 {offsets = [0, 1], sizes = [1, 1], strides = [1, 1]} : vector<1x2xf32> to vector<1x1xf32>
    %603 = vector.broadcast %602 : vector<1x1xf32> to vector<8x1xf32>
    %604 = arith.cmpf ogt, %601, %603 : vector<8x1xf32>
    %605 = arith.extui %604 : vector<8x1xi1> to vector<8x1xi32>
    %606 = arith.sitofp %605 : vector<8x1xi32> to vector<8x1xf32>
    %c1_i32_116 = arith.constant 1 : i32
    %607 = vector.broadcast %c1_i32_116 : i32 to vector<1x2xi32>
    %608 = arith.cmpi eq, %10, %607 : vector<1x2xi32>
    %609 = vector.shape_cast %608 : vector<1x2xi1> to vector<1x2xi1>
    %610 = vector.broadcast %609 : vector<1x2xi1> to vector<8x2xi1>
    %611 = vector.shape_cast %606 : vector<8x1xf32> to vector<8x1xf32>
    %612 = vector.broadcast %611 : vector<8x1xf32> to vector<8x2xf32>
    %613 = arith.select %610, %612, %597 : vector<8x2xi1>, vector<8x2xf32>
    %614 = arith.addf %571, %613 : vector<8x2xf32>
    %c14_i32 = arith.constant 14 : i32
    %cst_117 = arith.constant 0.899999976 : f32
    %615 = vector.broadcast %cst_117 : f32 to vector<8x32xf32>
    %616 = arith.mulf %615, %580 : vector<8x32xf32>
    %617 = arith.addf %616, %6 : vector<8x32xf32>
    %cst_118 = arith.constant 1.000000e+00 : f32
    %618 = vector.broadcast %cst_118 : f32 to vector<8x32xf32>
    %619 = arith.cmpf ogt, %617, %618 : vector<8x32xf32>
    %620 = arith.extui %619 : vector<8x32xi1> to vector<8x32xi32>
    %621 = arith.sitofp %620 : vector<8x32xi32> to vector<8x32xf32>
    %cst_119 = arith.constant 0.000000e+00 : f32
    %622 = vector.broadcast %cst_119 : f32 to vector<8x32xf32>
    %623 = arith.select %619, %622, %617 : vector<8x32xi1>, vector<8x32xf32>
    %cst_120 = arith.constant 0.000000e+00 : f32
    %624 = vector.broadcast %cst_120 : f32 to vector<8x2xf32>
    %625 = vector.broadcast %7 : vector<1x32xf32> to vector<8x32xf32>
    %626 = arith.mulf %621, %625 : vector<8x32xf32>
    %cst_121 = arith.constant dense<0.000000e+00> : vector<8xf32>
    %627 = vector.multi_reduction <add>, %626, %cst_121 [1] : vector<8x32xf32> to vector<8xf32>
    %628 = vector.shape_cast %627 : vector<8xf32> to vector<8x1xf32>
    %629 = vector.extract_strided_slice %9 {offsets = [0, 0], sizes = [1, 1], strides = [1, 1]} : vector<1x2xf32> to vector<1x1xf32>
    %630 = vector.broadcast %629 : vector<1x1xf32> to vector<8x1xf32>
    %631 = arith.cmpf ogt, %628, %630 : vector<8x1xf32>
    %632 = arith.extui %631 : vector<8x1xi1> to vector<8x1xi32>
    %633 = arith.sitofp %632 : vector<8x1xi32> to vector<8x1xf32>
    %c0_i32_122 = arith.constant 0 : i32
    %634 = vector.broadcast %c0_i32_122 : i32 to vector<1x2xi32>
    %635 = arith.cmpi eq, %10, %634 : vector<1x2xi32>
    %636 = vector.shape_cast %635 : vector<1x2xi1> to vector<1x2xi1>
    %637 = vector.broadcast %636 : vector<1x2xi1> to vector<8x2xi1>
    %638 = vector.shape_cast %633 : vector<8x1xf32> to vector<8x1xf32>
    %639 = vector.broadcast %638 : vector<8x1xf32> to vector<8x2xf32>
    %640 = arith.select %637, %639, %624 : vector<8x2xi1>, vector<8x2xf32>
    %641 = vector.broadcast %8 : vector<1x32xf32> to vector<8x32xf32>
    %642 = arith.mulf %621, %641 : vector<8x32xf32>
    %cst_123 = arith.constant dense<0.000000e+00> : vector<8xf32>
    %643 = vector.multi_reduction <add>, %642, %cst_123 [1] : vector<8x32xf32> to vector<8xf32>
    %644 = vector.shape_cast %643 : vector<8xf32> to vector<8x1xf32>
    %645 = vector.extract_strided_slice %9 {offsets = [0, 1], sizes = [1, 1], strides = [1, 1]} : vector<1x2xf32> to vector<1x1xf32>
    %646 = vector.broadcast %645 : vector<1x1xf32> to vector<8x1xf32>
    %647 = arith.cmpf ogt, %644, %646 : vector<8x1xf32>
    %648 = arith.extui %647 : vector<8x1xi1> to vector<8x1xi32>
    %649 = arith.sitofp %648 : vector<8x1xi32> to vector<8x1xf32>
    %c1_i32_124 = arith.constant 1 : i32
    %650 = vector.broadcast %c1_i32_124 : i32 to vector<1x2xi32>
    %651 = arith.cmpi eq, %10, %650 : vector<1x2xi32>
    %652 = vector.shape_cast %651 : vector<1x2xi1> to vector<1x2xi1>
    %653 = vector.broadcast %652 : vector<1x2xi1> to vector<8x2xi1>
    %654 = vector.shape_cast %649 : vector<8x1xf32> to vector<8x1xf32>
    %655 = vector.broadcast %654 : vector<8x1xf32> to vector<8x2xf32>
    %656 = arith.select %653, %655, %640 : vector<8x2xi1>, vector<8x2xf32>
    %657 = arith.addf %614, %656 : vector<8x2xf32>
    %c15_i32 = arith.constant 15 : i32
    %cst_125 = arith.constant 0.899999976 : f32
    %658 = vector.broadcast %cst_125 : f32 to vector<8x32xf32>
    %659 = arith.mulf %658, %623 : vector<8x32xf32>
    %660 = arith.addf %659, %6 : vector<8x32xf32>
    %cst_126 = arith.constant 1.000000e+00 : f32
    %661 = vector.broadcast %cst_126 : f32 to vector<8x32xf32>
    %662 = arith.cmpf ogt, %660, %661 : vector<8x32xf32>
    %663 = arith.extui %662 : vector<8x32xi1> to vector<8x32xi32>
    %664 = arith.sitofp %663 : vector<8x32xi32> to vector<8x32xf32>
    %cst_127 = arith.constant 0.000000e+00 : f32
    %665 = vector.broadcast %cst_127 : f32 to vector<8x32xf32>
    %666 = arith.select %662, %665, %660 : vector<8x32xi1>, vector<8x32xf32>
    %cst_128 = arith.constant 0.000000e+00 : f32
    %667 = vector.broadcast %cst_128 : f32 to vector<8x2xf32>
    %668 = vector.broadcast %7 : vector<1x32xf32> to vector<8x32xf32>
    %669 = arith.mulf %664, %668 : vector<8x32xf32>
    %cst_129 = arith.constant dense<0.000000e+00> : vector<8xf32>
    %670 = vector.multi_reduction <add>, %669, %cst_129 [1] : vector<8x32xf32> to vector<8xf32>
    %671 = vector.shape_cast %670 : vector<8xf32> to vector<8x1xf32>
    %672 = vector.extract_strided_slice %9 {offsets = [0, 0], sizes = [1, 1], strides = [1, 1]} : vector<1x2xf32> to vector<1x1xf32>
    %673 = vector.broadcast %672 : vector<1x1xf32> to vector<8x1xf32>
    %674 = arith.cmpf ogt, %671, %673 : vector<8x1xf32>
    %675 = arith.extui %674 : vector<8x1xi1> to vector<8x1xi32>
    %676 = arith.sitofp %675 : vector<8x1xi32> to vector<8x1xf32>
    %c0_i32_130 = arith.constant 0 : i32
    %677 = vector.broadcast %c0_i32_130 : i32 to vector<1x2xi32>
    %678 = arith.cmpi eq, %10, %677 : vector<1x2xi32>
    %679 = vector.shape_cast %678 : vector<1x2xi1> to vector<1x2xi1>
    %680 = vector.broadcast %679 : vector<1x2xi1> to vector<8x2xi1>
    %681 = vector.shape_cast %676 : vector<8x1xf32> to vector<8x1xf32>
    %682 = vector.broadcast %681 : vector<8x1xf32> to vector<8x2xf32>
    %683 = arith.select %680, %682, %667 : vector<8x2xi1>, vector<8x2xf32>
    %684 = vector.broadcast %8 : vector<1x32xf32> to vector<8x32xf32>
    %685 = arith.mulf %664, %684 : vector<8x32xf32>
    %cst_131 = arith.constant dense<0.000000e+00> : vector<8xf32>
    %686 = vector.multi_reduction <add>, %685, %cst_131 [1] : vector<8x32xf32> to vector<8xf32>
    %687 = vector.shape_cast %686 : vector<8xf32> to vector<8x1xf32>
    %688 = vector.extract_strided_slice %9 {offsets = [0, 1], sizes = [1, 1], strides = [1, 1]} : vector<1x2xf32> to vector<1x1xf32>
    %689 = vector.broadcast %688 : vector<1x1xf32> to vector<8x1xf32>
    %690 = arith.cmpf ogt, %687, %689 : vector<8x1xf32>
    %691 = arith.extui %690 : vector<8x1xi1> to vector<8x1xi32>
    %692 = arith.sitofp %691 : vector<8x1xi32> to vector<8x1xf32>
    %c1_i32_132 = arith.constant 1 : i32
    %693 = vector.broadcast %c1_i32_132 : i32 to vector<1x2xi32>
    %694 = arith.cmpi eq, %10, %693 : vector<1x2xi32>
    %695 = vector.shape_cast %694 : vector<1x2xi1> to vector<1x2xi1>
    %696 = vector.broadcast %695 : vector<1x2xi1> to vector<8x2xi1>
    %697 = vector.shape_cast %692 : vector<8x1xf32> to vector<8x1xf32>
    %698 = vector.broadcast %697 : vector<8x1xf32> to vector<8x2xf32>
    %699 = arith.select %696, %698, %683 : vector<8x2xi1>, vector<8x2xf32>
    %700 = arith.addf %657, %699 : vector<8x2xf32>
    %701 = tpu.iota {dimensions = array<i32: 1>} : vector<8x128xi32>
    %cst_133 = arith.constant 0.000000e+00 : f32
    %702 = vector.broadcast %cst_133 : f32 to vector<8x128xf32>
    %c0_i32_134 = arith.constant 0 : i32
    %703 = vector.broadcast %c0_i32_134 : i32 to vector<8x128xi32>
    %704 = arith.cmpi eq, %701, %703 : vector<8x128xi32>
    %705 = vector.extract_strided_slice %700 {offsets = [0, 0], sizes = [8, 1], strides = [1, 1]} : vector<8x2xf32> to vector<8x1xf32>
    %cst_135 = arith.constant 6.250000e-02 : f32
    %706 = vector.broadcast %cst_135 : f32 to vector<8x1xf32>
    %707 = arith.mulf %705, %706 : vector<8x1xf32>
    %708 = vector.shape_cast %707 : vector<8x1xf32> to vector<8x1xf32>
    %709 = vector.broadcast %708 : vector<8x1xf32> to vector<8x128xf32>
    %710 = arith.select %704, %709, %702 : vector<8x128xi1>, vector<8x128xf32>
    %c1_i32_136 = arith.constant 1 : i32
    %711 = vector.broadcast %c1_i32_136 : i32 to vector<8x128xi32>
    %712 = arith.cmpi eq, %701, %711 : vector<8x128xi32>
    %713 = vector.extract_strided_slice %700 {offsets = [0, 1], sizes = [8, 1], strides = [1, 1]} : vector<8x2xf32> to vector<8x1xf32>
    %cst_137 = arith.constant 6.250000e-02 : f32
    %714 = vector.broadcast %cst_137 : f32 to vector<8x1xf32>
    %715 = arith.mulf %713, %714 : vector<8x1xf32>
    %716 = vector.shape_cast %715 : vector<8x1xf32> to vector<8x1xf32>
    %717 = vector.broadcast %716 : vector<8x1xf32> to vector<8x128xf32>
    %718 = arith.select %712, %717, %710 : vector<8x128xi1>, vector<8x128xf32>
    %c0_138 = arith.constant 0 : index
    %c0_139 = arith.constant 0 : index
    %719 = vector.load %arg3[%c0_138, %c0_139] : memref<8x128xf32, #tpu.memory_space<vmem>>, vector<8x128xf32>
    tpu.vector_store %arg3[%c0_138, %c0_139], %718 {strides = array<i32>} : memref<8x128xf32, #tpu.memory_space<vmem>>, vector<8x128xf32>,
    return
  }
  func.func @transform_0(%arg0: i32) -> (i32, i32) {
    %c0_i32 = arith.constant 0 : i32
    %c0_i32_0 = arith.constant 0 : i32
    return %arg0, %c0_i32 : i32, i32
  }
  func.func @transform_1(%arg0: i32) -> (i32, i32) {
    %c0_i32 = arith.constant 0 : i32
    %c0_i32_0 = arith.constant 0 : i32
    %c0_i32_1 = arith.constant 0 : i32
    return %c0_i32, %c0_i32_0 : i32, i32
  }
  func.func @transform_2(%arg0: i32) -> (i32, i32) {
    %c0_i32 = arith.constant 0 : i32
    %c0_i32_0 = arith.constant 0 : i32
    return %arg0, %c0_i32 : i32, i32
  }
}

</mosaic_0001>

<llo_original>
// kernel: tpu_custom_call.1
$region0: #{tpu_custom_call.1}
  #allocation0 [shape = 'u32[]', space=smem, size = 0x4, offset = 0x4, fixed_abs, tag = 'smem constant byte address 0x4 - core index']
  #allocation1 [shape = 'u32[144,128]{1,0:T(1,128)}', space=vmem, size = 0x12000, scoped, tag = 'internal scratch']
  %s0 = inlined_call_operand.hbm [shape: f32[16,16], index: 0, kind: input, shape index: {}]
  %s1 = inlined_call_operand.hbm [shape: f32[32,32], index: 1, kind: input, shape index: {}]
  %s2 = inlined_call_operand.hbm [shape: f32[16,128], index: 2, kind: output, shape index: {}]
  %s3 = sld [smem:[#allocation0]]
  $region49: #{tpu_custom_call.1} parent=0
    _
  %s5 = ssub.s32 1, %s3
  %s6 = scalar_select 0, %s5, %s3
  $region1: #{tpu_custom_call.1} parent=0
    #allocation2 [shape = 'u8[8192]{0}', space=vmem, size = 0x2000, scoped, tag = 'input window, operand 0']
    #allocation3 [shape = 's32[2]{0}', space=sflag, size = 0x8, scoped, tag = 'scoped memory for tpu_custom_call.1']
    #allocation4 [shape = 's32[2]{0}', space=sflag, size = 0x8, scoped, tag = 'scoped memory for tpu_custom_call.1']
    #allocation5 [shape = 'u8[16384]{0}', space=vmem, size = 0x4000, scoped, tag = 'input window, operand 1, single buffered']
    #allocation6 [shape = 's32[1]{0}', space=sflag, size = 0x4, scoped, tag = 'scoped memory for tpu_custom_call.1']
    #allocation7 [shape = 'u8[8192]{0}', space=vmem, size = 0x2000, scoped, tag = 'output window, operand 0']
    %7 = vsyncpa [#allocation3], 0
    %s8 = scalar_lea.sflag [#allocation3], 1
    %9 = vsyncpa %s8, 0
    %10 = vsyncpa [#allocation6], 0
    %11 = vsyncpa [#allocation4], 0
    %s12 = scalar_lea.sflag [#allocation4], 1
    %13 = vsyncpa %s12, 0
    loop: start=0, step=1, limit=4
    $region2: #{tpu_custom_call.1} parent=1 // loop_pre_header
      _
    $region3: #{tpu_custom_call.1} parent=1 // loop_header
      %s15 = sphi 0, %s19
      %p16 = scmp.ge.s32.totalorder %s15, 4
      %s25 = sphi 0, %s27
      %s28 = sphi 0, %s25
      %s29 = sphi 0, %s28
      %s45 = sphi 0, %s29
      %s49 = sphi 0, %s49
      %s51 = sphi 0, %s49
      %s52 = sphi 0, %s51
      %s66 = sphi 0, %s52
      %s72 = sphi 0, %s74
      %s75 = sphi 0, %s72
      %s76 = sphi 0, %s75
      %s92 = sphi 0, %s76
    $region4: #{tpu_custom_call.1} parent=1 // loop_header_branch
      %18 = sbr.rel (%p16) target = $region8
    $region5: #{tpu_custom_call.1} parent=1 // loop_body
      %s20 = ssub.s32 %s15, 1
      %s21 = ssub.s32 %s15, 2
      %s22 = sadd.s32 %s15, 1
      %s23 = ssub.s32 %s15, %s22
      %p24 = scmp.eq.s32.totalorder %s23, 0
      %s26 = sadd.s32 %s25, 1
      %s27 = scalar_select %p24, %s25, %s26
      %p30 = pneg %p24
      %p31 = scmp.eq.s32.totalorder %s15, 1
      %p32 = por %p30, %p31
      %p33 = scmp.ne.s32.totalorder %s25, %s28
      %p34 = scmp.eq.s32.totalorder %s15, 0
      %p35 = por %p33, %p34
      %p36 = scmp.ne.s32.totalorder %s25, %s28
      %p37 = scmp.eq.s32.totalorder %s20, 1
      %p38 = por %p36, %p37
      %p39 = scmp.ne.s32.totalorder %s28, %s29
      %p40 = scmp.eq.s32.totalorder %s20, 0
      %p41 = por %p39, %p40
      %p42 = scmp.ne.s32.totalorder %s28, %s29
      %p43 = scmp.eq.s32.totalorder %s21, 1
      %p44 = por %p42, %p43
      %p46 = scmp.ne.s32.totalorder %s29, %s45
      %p47 = scmp.eq.s32.totalorder %s21, 0
      %p48 = por %p46, %p47
      %s50 = sadd.s32 %s49, 1
      %p53 = scmp.eq.s32.totalorder %s15, 1
      %p54 = scmp.ne.s32.totalorder %s49, %s51
      %p55 = scmp.eq.s32.totalorder %s15, 0
      %p56 = por %p54, %p55
      %p57 = scmp.ne.s32.totalorder %s49, %s51
      %p58 = scmp.eq.s32.totalorder %s20, 1
      %p59 = por %p57, %p58
      %p60 = scmp.ne.s32.totalorder %s51, %s52
      %p61 = scmp.eq.s32.totalorder %s20, 0
      %p62 = por %p60, %p61
      %p63 = scmp.ne.s32.totalorder %s51, %s52
      %p64 = scmp.eq.s32.totalorder %s21, 1
      %p65 = por %p63, %p64
      %p67 = scmp.ne.s32.totalorder %s52, %s66
      %p68 = scmp.eq.s32.totalorder %s21, 0
      %p69 = por %p67, %p68
      %s70 = ssub.s32 %s15, %s22
      %p71 = scmp.eq.s32.totalorder %s70, 0
      %s73 = sadd.s32 %s72, 1
      %s74 = scalar_select %p71, %s72, %s73
      %p77 = pneg %p71
      %p78 = scmp.eq.s32.totalorder %s15, 1
      %p79 = por %p77, %p78
      %p80 = scmp.ne.s32.totalorder %s72, %s75
      %p81 = scmp.eq.s32.totalorder %s15, 0
      %p82 = por %p80, %p81
      %p83 = scmp.ne.s32.totalorder %s72, %s75
      %p84 = scmp.eq.s32.totalorder %s20, 1
      %p85 = por %p83, %p84
      %p86 = scmp.ne.s32.totalorder %s75, %s76
      %p87 = scmp.eq.s32.totalorder %s20, 0
      %p88 = por %p86, %p87
      %p89 = scmp.ne.s32.totalorder %s75, %s76
      %p90 = scmp.eq.s32.totalorder %s21, 1
      %p91 = por %p89, %p90
      %p93 = scmp.ne.s32.totalorder %s76, %s92
      %p94 = scmp.eq.s32.totalorder %s21, 0
      %p95 = por %p93, %p94
      %p96 = scmp.le.s32.totalorder 1, %s15
      %p97 = scmp.lt.s32.totalorder %s15, 3
      %p98 = pnand %p96, %p97
      %p99 = pneg %p98
      // Predicated region
      $region9: #{tpu_custom_call.1} parent=5 // pred_check
        _
      $region10: #{tpu_custom_call.1} parent=5 // pred_check_branch
        %101 = sbr.rel (%p98) target = $region12
      $region11: #{tpu_custom_call.1} parent=5 // pred_region
        %s102 = ssub.s32 %s15, 1
        // Predicated region
        $region13: #{tpu_custom_call.1} parent=11 // pred_check
          %p103 = pneg %p62
        $region14: #{tpu_custom_call.1} parent=11 // pred_check_branch
          %105 = sbr.rel (%p103) target = $region16
        $region15: #{tpu_custom_call.1} parent=11 // pred_region
          %s107 = ssub.s32 512, 512
          %108 = vsyncadd [#allocation6], %s107
          %s109 = sshll.u32 [#allocation5], 4
          %s110 = int_to_ptr.vmem [resolvable:$true] %s109
          %115 = dma.hbm_to_vmem [thread:$0]  %s1, 512, %s110, [#allocation6], 128, 128, 8
        $region16: #{tpu_custom_call.1} parent=11 // pred_fallthru
          _
      $region12: #{tpu_custom_call.1} parent=5 // pred_fallthru
        _
      %p116 = scmp.lt.s32.totalorder %s15, 2
      // Predicated region
      $region17: #{tpu_custom_call.1} parent=5 // pred_check
        %p117 = pneg %p116
      $region18: #{tpu_custom_call.1} parent=5 // pred_check_branch
        %119 = sbr.rel (%p117) target = $region20
      $region19: #{tpu_custom_call.1} parent=5 // pred_region
        // Predicated region
        $region21: #{tpu_custom_call.1} parent=19 // pred_check
          %p120 = pneg %p35
        $region22: #{tpu_custom_call.1} parent=19 // pred_check_branch
          %122 = sbr.rel (%p120) target = $region24
        $region23: #{tpu_custom_call.1} parent=19 // pred_region
          %s123 = sand.u32 %s25, 1
          %s124 = scalar_lea.sflag [#allocation3], %s123
          %s125 = sand.u32 %s25, 1
          %s126 = smul.addr %s125, 8
          %s127 = scalar_lea.vmem [#allocation2], %s126
          %s129 = ssub.s32 128, 128
          %130 = vsyncadd %s124, %s129
          %s131 = smul.addr %s15, 128
          %s132 = scalar_lea.hbm %s0, %s131
          %s134 = sshll.u32 %s127, 4
          %s135 = int_to_ptr.vmem [resolvable:$true] %s134
          %137 = dma.hbm_to_vmem [thread:$0]  %s132, 128, %s135, %s124
        $region24: #{tpu_custom_call.1} parent=19 // pred_fallthru
          _
      $region20: #{tpu_custom_call.1} parent=5 // pred_fallthru
        _
      %p138 = scmp.le.s32.totalorder 1, %s15
      %p139 = scmp.lt.s32.totalorder %s15, 3
      %p140 = pnand %p138, %p139
      %p141 = pneg %p140
      // Predicated region
      $region25: #{tpu_custom_call.1} parent=5 // pred_check
        _
      $region26: #{tpu_custom_call.1} parent=5 // pred_check_branch
        %143 = sbr.rel (%p140) target = $region28
      $region27: #{tpu_custom_call.1} parent=5 // pred_region
        %s144 = ssub.s32 %s15, 1
        %s145 = sand.u32 %s28, 1
        %s146 = scalar_lea.sflag [#allocation3], %s145
        %s147 = sand.u32 %s28, 1
        %s148 = smul.addr %s147, 8
        %s149 = scalar_lea.vmem [#allocation2], %s148
        // Predicated region
        $region29: #{tpu_custom_call.1} parent=27 // pred_check
          %p150 = pneg %p41
        $region30: #{tpu_custom_call.1} parent=27 // pred_check_branch
          %152 = sbr.rel (%p150) target = $region32
        $region31: #{tpu_custom_call.1} parent=27 // pred_region
          %153 = dma.done %s146, 128
        $region32: #{tpu_custom_call.1} parent=27 // pred_fallthru
          _
        // Predicated region
        $region33: #{tpu_custom_call.1} parent=27 // pred_check
          %p154 = pneg %p62
        $region34: #{tpu_custom_call.1} parent=27 // pred_check_branch
          %156 = sbr.rel (%p154) target = $region36
        $region35: #{tpu_custom_call.1} parent=27 // pred_region
          %157 = dma.done [#allocation6], 512
        $region36: #{tpu_custom_call.1} parent=27 // pred_fallthru
          _
        %s158 = sand.u32 %s28, 1
        %s159 = scalar_lea.sflag [#allocation3], %s158
        %s160 = sand.u32 %s28, 1
        %s161 = smul.addr %s160, 8
        %s162 = scalar_lea.vmem [#allocation2], %s161
        %p163 = pneg %p41
        %p164 = pneg %p38
        %p165 = pneg %p62
        %p166 = pneg %p59
        %p167 = pneg %p88
        %p168 = pneg %p85
        %s169 = sand.u32 %s75, 1
        %s170 = scalar_lea.sflag [#allocation4], %s169
        %s171 = sand.u32 %s75, 1
        %s172 = smul.addr %s171, 8
        %s173 = scalar_lea.vmem [#allocation7], %s172
        %v174 = vld [vmem:[%s149] sm:$0xff]
        %v175 = vld [vmem:[#allocation5] sm:$0xff]
        %v176 = vld [vmem:[#allocation5 + $0x8] sm:$0xff]
        %v177 = vld [vmem:[#allocation5 + $0x10] sm:$0xff]
        %v178 = vld [vmem:[#allocation5 + $0x18] sm:$0xff]
        %v179 = vlaneseq
        %v180 = vshrl.u32 %v179, 7
        %v181 = vsub.s32 0, %v180
        %v182 = vrot.slane %v177, %v181
        %vm183 = vcmask 130048
        %v185 = vsel %vm183, %v174, 0
        %187 = vmatprep.subr.mxu0 0.0
        %188 = vmatpush1.msra.mxu0 %v175
        %189 = vmatprep.subr.mxu0 0.0
        %190 = vmatpush1.msra.mxu0 %v176
        %191 = vmatprep.subr.mxu0 0.0
        %192 = vmatpush1.msra.mxu0 0.0
        %193 = vmatprep.subr.mxu0 0.0
        %194 = vmatpush1.msra.mxu0 0.0
        %195 = vmatprep.subr.mxu0 0.0
        %196 = vmatpush1.msra.mxu0 0.0
        %197 = vmatprep.subr.mxu0 0.0
        %198 = vmatpush1.msra.mxu0 0.0
        %199 = vmatprep.subr.mxu0 0.0
        %200 = vmatpush1.msra.mxu0 0.0
        %201 = vmatprep.subr.mxu0 0.0
        %202 = vmatpush1.msra.mxu0 0.0
        %203 = vmatprep.subr.mxu0 0.0
        %204 = vmatpush1.msra.mxu0 0.0
        %205 = vmatprep.subr.mxu0 0.0
        %206 = vmatpush1.msra.mxu0 0.0
        %207 = vmatprep.subr.mxu0 0.0
        %208 = vmatpush1.msra.mxu0 0.0
        %209 = vmatprep.subr.mxu0 0.0
        %210 = vmatpush1.msra.mxu0 0.0
        %211 = vmatprep.subr.mxu0 0.0
        %212 = vmatpush1.msra.mxu0 0.0
        %213 = vmatprep.subr.mxu0 0.0
        %214 = vmatpush1.msra.mxu0 0.0
        %215 = vmatprep.subr.mxu0 0.0
        %216 = vmatpush1.msra.mxu0 0.0
        %217 = vmatprep.subr.mxu0 0.0
        %218 = vmatpush1.msra.mxu0 0.0
        %219 = vmatprep.subr.mxu0 0.0
        %220 = vmatpush1.msra.mxu0 0.0
        %221 = vmatprep.subr.mxu0 0.0
        %222 = vmatpush1.msra.mxu0 0.0
        %223 = vmatprep.subr.mxu0 0.0
        %224 = vmatpush1.msra.mxu0 0.0
        %225 = vmatprep.subr.mxu0 0.0
        %226 = vmatpush1.msra.mxu0 0.0
        %227 = vmatprep.subr.mxu0 0.0
        %228 = vmatpush1.msra.mxu0 0.0
        %229 = vmatprep.subr.mxu0 0.0
        %230 = vmatpush1.msra.mxu0 0.0
        %231 = vmatprep.subr.mxu0 0.0
        %232 = vmatpush1.msra.mxu0 0.0
        %233 = vmatprep.subr.mxu0 0.0
        %234 = vmatpush1.msra.mxu0 0.0
        %235 = vmatprep.subr.mxu0 0.0
        %236 = vmatpush1.msra.mxu0 0.0
        %237 = vmatprep.subr.mxu0 0.0
        %238 = vmatpush1.msra.mxu0 0.0
        %239 = vmatprep.subr.mxu0 0.0
        %240 = vmatpush1.msra.mxu0 0.0
        %241 = vmatprep.subr.mxu0 0.0
        %242 = vmatpush1.msra.mxu0 0.0
        %243 = vmatprep.subr.mxu0 0.0
        %244 = vmatpush1.msra.mxu0 0.0
        %245 = vmatprep.subr.mxu0 0.0
        %246 = vmatpush1.msra.mxu0 0.0
        %247 = vmatprep.subr.mxu0 0.0
        %248 = vmatpush1.msra.mxu0 0.0
        %249 = vmatprep.subr.mxu0 0.0
        %250 = vmatpush1.msra.mxu0 0.0
        %251 = vmatprep.mubr.f32.mxu0 0.0
        %252 = vmatmul.mubr.f32.gmra.mrb[0].mxu0 %v185
        %v253 = vpop.f32.mrb[0].mxu0
        %v254 = vadd.f32 %v182, %v253
        %v255 = vpop.f32.mrb[0].mxu0
        %256 = vdwg.mxu0
        %v257 = vlaneseq
        %v258 = vand.u32 %v257, 127
        %v259 = vadd.f32 %v254, 0.0
        %vm260 = vcmp.gt.f32.partialorder %v259, 1.0
        %v261 = vsel %vm260, 1, 0
        %v262 = vcvt.s32.f32 %v261
        %v263 = vsel %vm260, 0.0, %v259
        %v264 = vlaneseq
        %v265 = vshrl.u32 %v264, 7
        %v266 = vsub.s32 0, %v265
        %v267 = vrot.slane %v178, %v266
        %v268 = vmul.f32 %v262, %v267
        %vm269 = vcmask 261120
        %v270 = vsel %vm269, %v268, 0.0
        %271 = vadd.xlane.f32.xlu0 %v270
        %v272 = vpop.xlane.xlu0 %271
        %v273 = vlaneseq
        %v274 = vshrl.u32 %v273, 7
        %v275 = vsub.s32 2, %v274
        %v276 = vrot.slane %v178, %v275
        %vm277 = vcmp.gt.f32.partialorder %v272, %v276
        %v278 = vsel %vm277, 1, 0
        %v279 = vcvt.s32.f32 %v278
        %vm280 = vcmp.eq.s32.totalorder %v258, 0
        %v281 = vsel %vm280, 1, 0
        %vm282 = vcmp.eq.s32.totalorder %v281, 1
        %284 = vset.pattern.permute.xlu0 0
        %285 = vperm.xlu0 %284, %v279
        %v286 = vpop.permute.xlu0 %285
        %v288 = vsel %vm282, %v286, 0.0
        %v289 = vlaneseq
        %v290 = vshrl.u32 %v289, 7
        %v291 = vsub.s32 1, %v290
        %v292 = vrot.slane %v178, %v291
        %v293 = vmul.f32 %v262, %v292
        %v294 = vsel %vm269, %v293, 0.0
        %295 = vadd.xlane.f32.xlu0 %v294
        %v296 = vpop.xlane.xlu0 %295
        %vm297 = vcmp.gt.f32.partialorder %v296, %v276
        %v298 = vsel %vm297, 1, 0
        %v299 = vcvt.s32.f32 %v298
        %vm300 = vcmp.eq.s32.totalorder %v258, 1
        %v301 = vsel %vm300, 1, 0
        %vm302 = vcmp.eq.s32.totalorder %v301, 1
        %304 = vset.pattern.permute.xlu0 1
        %305 = vperm.xlu0 %304, %v299
        %v306 = vpop.permute.xlu0 %305
        %v308 = vsel %vm302, %v306, %v288
        %v309 = vadd.f32 %v308, 0.0
        %v310 = vmul.f32 %v263, 0.9
        %v311 = vadd.f32 %v310, %v254
        %vm312 = vcmp.gt.f32.partialorder %v311, 1.0
        %v313 = vsel %vm312, 1, 0
        %v314 = vcvt.s32.f32 %v313
        %v315 = vsel %vm312, 0.0, %v311
        %v316 = vmul.f32 %v314, %v267
        %v317 = vsel %vm269, %v316, 0.0
        %318 = vadd.xlane.f32.xlu0 %v317
        %v319 = vpop.xlane.xlu0 %318
        %vm320 = vcmp.gt.f32.partialorder %v319, %v276
        %v321 = vsel %vm320, 1, 0
        %v322 = vcvt.s32.f32 %v321
        %324 = vset.pattern.permute.xlu0 0
        %325 = vperm.xlu0 %324, %v322
        %v326 = vpop.permute.xlu0 %325
        %v328 = vsel %vm282, %v326, 0.0
        %v329 = vmul.f32 %v314, %v292
        %v330 = vsel %vm269, %v329, 0.0
        %331 = vadd.xlane.f32.xlu0 %v330
        %v332 = vpop.xlane.xlu0 %331
        %vm333 = vcmp.gt.f32.partialorder %v332, %v276
        %v334 = vsel %vm333, 1, 0
        %v335 = vcvt.s32.f32 %v334
        %337 = vset.pattern.permute.xlu0 1
        %338 = vperm.xlu0 %337, %v335
        %v339 = vpop.permute.xlu0 %338
        %v341 = vsel %vm302, %v339, %v328
        %v342 = vadd.f32 %v309, %v341
        %v343 = vmul.f32 %v315, 0.9
        %v344 = vadd.f32 %v343, %v254
        %vm345 = vcmp.gt.f32.partialorder %v344, 1.0
        %v346 = vsel %vm345, 1, 0
        %v347 = vcvt.s32.f32 %v346
        %v348 = vsel %vm345, 0.0, %v344
        %v349 = vmul.f32 %v347, %v267
        %v350 = vsel %vm269, %v349, 0.0
        %351 = vadd.xlane.f32.xlu0 %v350
        %v352 = vpop.xlane.xlu0 %351
        %vm353 = vcmp.gt.f32.partialorder %v352, %v276
        %v354 = vsel %vm353, 1, 0
        %v355 = vcvt.s32.f32 %v354
        %357 = vset.pattern.permute.xlu0 0
        %358 = vperm.xlu0 %357, %v355
        %v359 = vpop.permute.xlu0 %358
        %v361 = vsel %vm282, %v359, 0.0
        %v362 = vmul.f32 %v347, %v292
        %v363 = vsel %vm269, %v362, 0.0
        %364 = vadd.xlane.f32.xlu0 %v363
        %v365 = vpop.xlane.xlu0 %364
        %vm366 = vcmp.gt.f32.partialorder %v365, %v276
        %v367 = vsel %vm366, 1, 0
        %v368 = vcvt.s32.f32 %v367
        %370 = vset.pattern.permute.xlu0 1
        %371 = vperm.xlu0 %370, %v368
        %v372 = vpop.permute.xlu0 %371
        %v374 = vsel %vm302, %v372, %v361
        %v375 = vadd.f32 %v342, %v374
        %v376 = vmul.f32 %v348, 0.9
        %v377 = vadd.f32 %v376, %v254
        %vm378 = vcmp.gt.f32.partialorder %v377, 1.0
        %v379 = vsel %vm378, 1, 0
        %v380 = vcvt.s32.f32 %v379
        %v381 = vsel %vm378, 0.0, %v377
        %v382 = vmul.f32 %v380, %v267
        %v383 = vsel %vm269, %v382, 0.0
        %384 = vadd.xlane.f32.xlu0 %v383
        %v385 = vpop.xlane.xlu0 %384
        %vm386 = vcmp.gt.f32.partialorder %v385, %v276
        %v387 = vsel %vm386, 1, 0
        %v388 = vcvt.s32.f32 %v387
        %390 = vset.pattern.permute.xlu0 0
        %391 = vperm.xlu0 %390, %v388
        %v392 = vpop.permute.xlu0 %391
        %v394 = vsel %vm282, %v392, 0.0
        %v395 = vmul.f32 %v380, %v292
        %v396 = vsel %vm269, %v395, 0.0
        %397 = vadd.xlane.f32.xlu0 %v396
        %v398 = vpop.xlane.xlu0 %397
        %vm399 = vcmp.gt.f32.partialorder %v398, %v276
        %v400 = vsel %vm399, 1, 0
        %v401 = vcvt.s32.f32 %v400
        %403 = vset.pattern.permute.xlu0 1
        %404 = vperm.xlu0 %403, %v401
        %v405 = vpop.permute.xlu0 %404
        %v407 = vsel %vm302, %v405, %v394
        %v408 = vadd.f32 %v375, %v407
        %v409 = vmul.f32 %v381, 0.9
        %v410 = vadd.f32 %v409, %v254
        %vm411 = vcmp.gt.f32.partialorder %v410, 1.0
        %v412 = vsel %vm411, 1, 0
        %v413 = vcvt.s32.f32 %v412
        %v414 = vsel %vm411, 0.0, %v410
        %v415 = vmul.f32 %v413, %v267
        %v416 = vsel %vm269, %v415, 0.0
        %417 = vadd.xlane.f32.xlu0 %v416
        %v418 = vpop.xlane.xlu0 %417
        %vm419 = vcmp.gt.f32.partialorder %v418, %v276
        %v420 = vsel %vm419, 1, 0
        %v421 = vcvt.s32.f32 %v420
        %423 = vset.pattern.permute.xlu0 0
        %424 = vperm.xlu0 %423, %v421
        %v425 = vpop.permute.xlu0 %424
        %v427 = vsel %vm282, %v425, 0.0
        %v428 = vmul.f32 %v413, %v292
        %v429 = vsel %vm269, %v428, 0.0
        %430 = vadd.xlane.f32.xlu0 %v429
        %v431 = vpop.xlane.xlu0 %430
        %vm432 = vcmp.gt.f32.partialorder %v431, %v276
        %v433 = vsel %vm432, 1, 0
        %v434 = vcvt.s32.f32 %v433
        %436 = vset.pattern.permute.xlu0 1
        %437 = vperm.xlu0 %436, %v434
        %v438 = vpop.permute.xlu0 %437
        %v440 = vsel %vm302, %v438, %v427
        %v441 = vadd.f32 %v408, %v440
        %v442 = vmul.f32 %v414, 0.9
        %v443 = vadd.f32 %v442, %v254
        %vm444 = vcmp.gt.f32.partialorder %v443, 1.0
        %v445 = vsel %vm444, 1, 0
        %v446 = vcvt.s32.f32 %v445
        %v447 = vsel %vm444, 0.0, %v443
        %v448 = vmul.f32 %v446, %v267
        %v449 = vsel %vm269, %v448, 0.0
        %450 = vadd.xlane.f32.xlu0 %v449
        %v451 = vpop.xlane.xlu0 %450
        %vm452 = vcmp.gt.f32.partialorder %v451, %v276
        %v453 = vsel %vm452, 1, 0
        %v454 = vcvt.s32.f32 %v453
        %456 = vset.pattern.permute.xlu0 0
        %457 = vperm.xlu0 %456, %v454
        %v458 = vpop.permute.xlu0 %457
        %v460 = vsel %vm282, %v458, 0.0
        %v461 = vmul.f32 %v446, %v292
        %v462 = vsel %vm269, %v461, 0.0
        %463 = vadd.xlane.f32.xlu0 %v462
        %v464 = vpop.xlane.xlu0 %463
        %vm465 = vcmp.gt.f32.partialorder %v464, %v276
        %v466 = vsel %vm465, 1, 0
        %v467 = vcvt.s32.f32 %v466
        %469 = vset.pattern.permute.xlu0 1
        %470 = vperm.xlu0 %469, %v467
        %v471 = vpop.permute.xlu0 %470
        %v473 = vsel %vm302, %v471, %v460
        %v474 = vadd.f32 %v441, %v473
        %v475 = vmul.f32 %v447, 0.9
        %v476 = vadd.f32 %v475, %v254
        %vm477 = vcmp.gt.f32.partialorder %v476, 1.0
        %v478 = vsel %vm477, 1, 0
        %v479 = vcvt.s32.f32 %v478
        %v480 = vsel %vm477, 0.0, %v476
        %v481 = vmul.f32 %v479, %v267
        %v482 = vsel %vm269, %v481, 0.0
        %483 = vadd.xlane.f32.xlu0 %v482
        %v484 = vpop.xlane.xlu0 %483
        %vm485 = vcmp.gt.f32.partialorder %v484, %v276
        %v486 = vsel %vm485, 1, 0
        %v487 = vcvt.s32.f32 %v486
        %489 = vset.pattern.permute.xlu0 0
        %490 = vperm.xlu0 %489, %v487
        %v491 = vpop.permute.xlu0 %490
        %v493 = vsel %vm282, %v491, 0.0
        %v494 = vmul.f32 %v479, %v292
        %v495 = vsel %vm269, %v494, 0.0
        %496 = vadd.xlane.f32.xlu0 %v495
        %v497 = vpop.xlane.xlu0 %496
        %vm498 = vcmp.gt.f32.partialorder %v497, %v276
        %v499 = vsel %vm498, 1, 0
        %v500 = vcvt.s32.f32 %v499
        %502 = vset.pattern.permute.xlu0 1
        %503 = vperm.xlu0 %502, %v500
        %v504 = vpop.permute.xlu0 %503
        %v506 = vsel %vm302, %v504, %v493
        %v507 = vadd.f32 %v474, %v506
        %v508 = vmul.f32 %v480, 0.9
        %v509 = vadd.f32 %v508, %v254
        %vm510 = vcmp.gt.f32.partialorder %v509, 1.0
        %v511 = vsel %vm510, 1, 0
        %v512 = vcvt.s32.f32 %v511
        %v513 = vsel %vm510, 0.0, %v509
        %v514 = vmul.f32 %v512, %v267
        %v515 = vsel %vm269, %v514, 0.0
        %516 = vadd.xlane.f32.xlu0 %v515
        %v517 = vpop.xlane.xlu0 %516
        %vm518 = vcmp.gt.f32.partialorder %v517, %v276
        %v519 = vsel %vm518, 1, 0
        %v520 = vcvt.s32.f32 %v519
        %522 = vset.pattern.permute.xlu0 0
        %523 = vperm.xlu0 %522, %v520
        %v524 = vpop.permute.xlu0 %523
        %v526 = vsel %vm282, %v524, 0.0
        %v527 = vmul.f32 %v512, %v292
        %v528 = vsel %vm269, %v527, 0.0
        %529 = vadd.xlane.f32.xlu0 %v528
        %v530 = vpop.xlane.xlu0 %529
        %vm531 = vcmp.gt.f32.partialorder %v530, %v276
        %v532 = vsel %vm531, 1, 0
        %v533 = vcvt.s32.f32 %v532
        %535 = vset.pattern.permute.xlu0 1
        %536 = vperm.xlu0 %535, %v533
        %v537 = vpop.permute.xlu0 %536
        %v539 = vsel %vm302, %v537, %v526
        %v540 = vadd.f32 %v507, %v539
        %v541 = vmul.f32 %v513, 0.9
        %v542 = vadd.f32 %v541, %v254
        %vm543 = vcmp.gt.f32.partialorder %v542, 1.0
        %v544 = vsel %vm543, 1, 0
        %v545 = vcvt.s32.f32 %v544
        %v546 = vsel %vm543, 0.0, %v542
        %v547 = vmul.f32 %v545, %v267
        %v548 = vsel %vm269, %v547, 0.0
        %549 = vadd.xlane.f32.xlu0 %v548
        %v550 = vpop.xlane.xlu0 %549
        %vm551 = vcmp.gt.f32.partialorder %v550, %v276
        %v552 = vsel %vm551, 1, 0
        %v553 = vcvt.s32.f32 %v552
        %555 = vset.pattern.permute.xlu0 0
        %556 = vperm.xlu0 %555, %v553
        %v557 = vpop.permute.xlu0 %556
        %v559 = vsel %vm282, %v557, 0.0
        %v560 = vmul.f32 %v545, %v292
        %v561 = vsel %vm269, %v560, 0.0
        %562 = vadd.xlane.f32.xlu0 %v561
        %v563 = vpop.xlane.xlu0 %562
        %vm564 = vcmp.gt.f32.partialorder %v563, %v276
        %v565 = vsel %vm564, 1, 0
        %v566 = vcvt.s32.f32 %v565
        %568 = vset.pattern.permute.xlu0 1
        %569 = vperm.xlu0 %568, %v566
        %v570 = vpop.permute.xlu0 %569
        %v572 = vsel %vm302, %v570, %v559
        %v573 = vadd.f32 %v540, %v572
        %v574 = vmul.f32 %v546, 0.9
        %v575 = vadd.f32 %v574, %v254
        %vm576 = vcmp.gt.f32.partialorder %v575, 1.0
        %v577 = vsel %vm576, 1, 0
        %v578 = vcvt.s32.f32 %v577
        %v579 = vsel %vm576, 0.0, %v575
        %v580 = vmul.f32 %v578, %v267
        %v581 = vsel %vm269, %v580, 0.0
        %582 = vadd.xlane.f32.xlu0 %v581
        %v583 = vpop.xlane.xlu0 %582
        %vm584 = vcmp.gt.f32.partialorder %v583, %v276
        %v585 = vsel %vm584, 1, 0
        %v586 = vcvt.s32.f32 %v585
        %588 = vset.pattern.permute.xlu0 0
        %589 = vperm.xlu0 %588, %v586
        %v590 = vpop.permute.xlu0 %589
        %v592 = vsel %vm282, %v590, 0.0
        %v593 = vmul.f32 %v578, %v292
        %v594 = vsel %vm269, %v593, 0.0
        %595 = vadd.xlane.f32.xlu0 %v594
        %v596 = vpop.xlane.xlu0 %595
        %vm597 = vcmp.gt.f32.partialorder %v596, %v276
        %v598 = vsel %vm597, 1, 0
        %v599 = vcvt.s32.f32 %v598
        %601 = vset.pattern.permute.xlu0 1
        %602 = vperm.xlu0 %601, %v599
        %v603 = vpop.permute.xlu0 %602
        %v605 = vsel %vm302, %v603, %v592
        %v606 = vadd.f32 %v573, %v605
        %v607 = vmul.f32 %v579, 0.9
        %v608 = vadd.f32 %v607, %v254
        %vm609 = vcmp.gt.f32.partialorder %v608, 1.0
        %v610 = vsel %vm609, 1, 0
        %v611 = vcvt.s32.f32 %v610
        %v612 = vsel %vm609, 0.0, %v608
        %v613 = vmul.f32 %v611, %v267
        %v614 = vsel %vm269, %v613, 0.0
        %615 = vadd.xlane.f32.xlu0 %v614
        %v616 = vpop.xlane.xlu0 %615
        %vm617 = vcmp.gt.f32.partialorder %v616, %v276
        %v618 = vsel %vm617, 1, 0
        %v619 = vcvt.s32.f32 %v618
        %621 = vset.pattern.permute.xlu0 0
        %622 = vperm.xlu0 %621, %v619
        %v623 = vpop.permute.xlu0 %622
        %v625 = vsel %vm282, %v623, 0.0
        %v626 = vmul.f32 %v611, %v292
        %v627 = vsel %vm269, %v626, 0.0
        %628 = vadd.xlane.f32.xlu0 %v627
        %v629 = vpop.xlane.xlu0 %628
        %vm630 = vcmp.gt.f32.partialorder %v629, %v276
        %v631 = vsel %vm630, 1, 0
        %v632 = vcvt.s32.f32 %v631
        %634 = vset.pattern.permute.xlu0 1
        %635 = vperm.xlu0 %634, %v632
        %v636 = vpop.permute.xlu0 %635
        %v638 = vsel %vm302, %v636, %v625
        %v639 = vadd.f32 %v606, %v638
        %v640 = vmul.f32 %v612, 0.9
        %v641 = vadd.f32 %v640, %v254
        %vm642 = vcmp.gt.f32.partialorder %v641, 1.0
        %v643 = vsel %vm642, 1, 0
        %v644 = vcvt.s32.f32 %v643
        %v645 = vsel %vm642, 0.0, %v641
        %v646 = vmul.f32 %v644, %v267
        %v647 = vsel %vm269, %v646, 0.0
        %648 = vadd.xlane.f32.xlu0 %v647
        %v649 = vpop.xlane.xlu0 %648
        %vm650 = vcmp.gt.f32.partialorder %v649, %v276
        %v651 = vsel %vm650, 1, 0
        %v652 = vcvt.s32.f32 %v651
        %654 = vset.pattern.permute.xlu0 0
        %655 = vperm.xlu0 %654, %v652
        %v656 = vpop.permute.xlu0 %655
        %v658 = vsel %vm282, %v656, 0.0
        %v659 = vmul.f32 %v644, %v292
        %v660 = vsel %vm269, %v659, 0.0
        %661 = vadd.xlane.f32.xlu0 %v660
        %v662 = vpop.xlane.xlu0 %661
        %vm663 = vcmp.gt.f32.partialorder %v662, %v276
        %v664 = vsel %vm663, 1, 0
        %v665 = vcvt.s32.f32 %v664
        %667 = vset.pattern.permute.xlu0 1
        %668 = vperm.xlu0 %667, %v665
        %v669 = vpop.permute.xlu0 %668
        %v671 = vsel %vm302, %v669, %v658
        %v672 = vadd.f32 %v639, %v671
        %v673 = vmul.f32 %v645, 0.9
        %v674 = vadd.f32 %v673, %v254
        %vm675 = vcmp.gt.f32.partialorder %v674, 1.0
        %v676 = vsel %vm675, 1, 0
        %v677 = vcvt.s32.f32 %v676
        %v678 = vsel %vm675, 0.0, %v674
        %v679 = vmul.f32 %v677, %v267
        %v680 = vsel %vm269, %v679, 0.0
        %681 = vadd.xlane.f32.xlu0 %v680
        %v682 = vpop.xlane.xlu0 %681
        %vm683 = vcmp.gt.f32.partialorder %v682, %v276
        %v684 = vsel %vm683, 1, 0
        %v685 = vcvt.s32.f32 %v684
        %687 = vset.pattern.permute.xlu0 0
        %688 = vperm.xlu0 %687, %v685
        %v689 = vpop.permute.xlu0 %688
        %v691 = vsel %vm282, %v689, 0.0
        %v692 = vmul.f32 %v677, %v292
        %v693 = vsel %vm269, %v692, 0.0
        %694 = vadd.xlane.f32.xlu0 %v693
        %v695 = vpop.xlane.xlu0 %694
        %vm696 = vcmp.gt.f32.partialorder %v695, %v276
        %v697 = vsel %vm696, 1, 0
        %v698 = vcvt.s32.f32 %v697
        %700 = vset.pattern.permute.xlu0 1
        %701 = vperm.xlu0 %700, %v698
        %v702 = vpop.permute.xlu0 %701
        %v704 = vsel %vm302, %v702, %v691
        %v705 = vadd.f32 %v672, %v704
        %v706 = vmul.f32 %v678, 0.9
        %v707 = vadd.f32 %v706, %v254
        %vm708 = vcmp.gt.f32.partialorder %v707, 1.0
        %v709 = vsel %vm708, 1, 0
        %v710 = vcvt.s32.f32 %v709
        %v711 = vsel %vm708, 0.0, %v707
        %v712 = vmul.f32 %v710, %v267
        %v713 = vsel %vm269, %v712, 0.0
        %714 = vadd.xlane.f32.xlu0 %v713
        %v715 = vpop.xlane.xlu0 %714
        %vm716 = vcmp.gt.f32.partialorder %v715, %v276
        %v717 = vsel %vm716, 1, 0
        %v718 = vcvt.s32.f32 %v717
        %720 = vset.pattern.permute.xlu0 0
        %721 = vperm.xlu0 %720, %v718
        %v722 = vpop.permute.xlu0 %721
        %v724 = vsel %vm282, %v722, 0.0
        %v725 = vmul.f32 %v710, %v292
        %v726 = vsel %vm269, %v725, 0.0
        %727 = vadd.xlane.f32.xlu0 %v726
        %v728 = vpop.xlane.xlu0 %727
        %vm729 = vcmp.gt.f32.partialorder %v728, %v276
        %v730 = vsel %vm729, 1, 0
        %v731 = vcvt.s32.f32 %v730
        %733 = vset.pattern.permute.xlu0 1
        %734 = vperm.xlu0 %733, %v731
        %v735 = vpop.permute.xlu0 %734
        %v737 = vsel %vm302, %v735, %v724
        %v738 = vadd.f32 %v705, %v737
        %v739 = vmul.f32 %v711, 0.9
        %v740 = vadd.f32 %v739, %v254
        %vm741 = vcmp.gt.f32.partialorder %v740, 1.0
        %v742 = vsel %vm741, 1, 0
        %v743 = vcvt.s32.f32 %v742
        %v744 = vsel %vm741, 0.0, %v740
        %v745 = vmul.f32 %v743, %v267
        %v746 = vsel %vm269, %v745, 0.0
        %747 = vadd.xlane.f32.xlu0 %v746
        %v748 = vpop.xlane.xlu0 %747
        %vm749 = vcmp.gt.f32.partialorder %v748, %v276
        %v750 = vsel %vm749, 1, 0
        %v751 = vcvt.s32.f32 %v750
        %753 = vset.pattern.permute.xlu0 0
        %754 = vperm.xlu0 %753, %v751
        %v755 = vpop.permute.xlu0 %754
        %v757 = vsel %vm282, %v755, 0.0
        %v758 = vmul.f32 %v743, %v292
        %v759 = vsel %vm269, %v758, 0.0
        %760 = vadd.xlane.f32.xlu0 %v759
        %v761 = vpop.xlane.xlu0 %760
        %vm762 = vcmp.gt.f32.partialorder %v761, %v276
        %v763 = vsel %vm762, 1, 0
        %v764 = vcvt.s32.f32 %v763
        %766 = vset.pattern.permute.xlu0 1
        %767 = vperm.xlu0 %766, %v764
        %v768 = vpop.permute.xlu0 %767
        %v770 = vsel %vm302, %v768, %v757
        %v771 = vadd.f32 %v738, %v770
        %v772 = vmul.f32 %v744, 0.9
        %v773 = vadd.f32 %v772, %v254
        %vm774 = vcmp.gt.f32.partialorder %v773, 1.0
        %v775 = vsel %vm774, 1, 0
        %v776 = vcvt.s32.f32 %v775
        %v777 = vmul.f32 %v776, %v267
        %v778 = vsel %vm269, %v777, 0.0
        %779 = vadd.xlane.f32.xlu0 %v778
        %v780 = vpop.xlane.xlu0 %779
        %vm781 = vcmp.gt.f32.partialorder %v780, %v276
        %v782 = vsel %vm781, 1, 0
        %v783 = vcvt.s32.f32 %v782
        %785 = vset.pattern.permute.xlu0 0
        %786 = vperm.xlu0 %785, %v783
        %v787 = vpop.permute.xlu0 %786
        %v789 = vsel %vm282, %v787, 0.0
        %v790 = vmul.f32 %v776, %v292
        %v791 = vsel %vm269, %v790, 0.0
        %792 = vadd.xlane.f32.xlu0 %v791
        %v793 = vpop.xlane.xlu0 %792
        %vm794 = vcmp.gt.f32.partialorder %v793, %v276
        %v795 = vsel %vm794, 1, 0
        %v796 = vcvt.s32.f32 %v795
        %798 = vset.pattern.permute.xlu0 1
        %799 = vperm.xlu0 %798, %v796
        %v800 = vpop.permute.xlu0 %799
        %v802 = vsel %vm302, %v800, %v789
        %v803 = vadd.f32 %v771, %v802
        %v804 = vmul.f32 %v803, 0.0625
        %806 = vset.pattern.permute.xlu0 0
        %807 = vperm.xlu0 %806, %v804
        %v808 = vpop.permute.xlu0 %807
        %v810 = vsel %vm280, %v808, 0.0
        %811 = vset.pattern.permute.xlu0 1
        %812 = vperm.xlu0 %811, %v804
        %v813 = vpop.permute.xlu0 %812
        %v815 = vsel %vm300, %v813, %v810
        %816 = vst [vmem:[%s173] sm:$0xff] %v815
        %s817 = sand.u32 %s75, 1
        %s818 = scalar_lea.sflag [#allocation4], %s817
        %s819 = sand.u32 %s75, 1
        %s820 = smul.addr %s819, 8
        %s821 = scalar_lea.vmem [#allocation7], %s820
        // Predicated region
        $region37: #{tpu_custom_call.1} parent=27 // pred_check
          %p822 = pneg %p85
        $region38: #{tpu_custom_call.1} parent=27 // pred_check_branch
          %824 = sbr.rel (%p822) target = $region40
        $region39: #{tpu_custom_call.1} parent=27 // pred_region
          %s826 = ssub.s32 128, 128
          %827 = vsyncadd %s818, %s826
          %s828 = smul.addr %s20, 128
          %s829 = scalar_lea.hbm %s2, %s828
          %s831 = sshll.u32 %s821, 4
          %s832 = int_to_ptr.vmem [resolvable:$true] %s831
          %834 = dma.vmem_to_hbm [thread:$0]  %s832, 128, %s829, %s818
        $region40: #{tpu_custom_call.1} parent=27 // pred_fallthru
          _
      $region28: #{tpu_custom_call.1} parent=5 // pred_fallthru
        _
      %p835 = scmp.le.s32.totalorder 2, %s15
      // Predicated region
      $region41: #{tpu_custom_call.1} parent=5 // pred_check
        %p836 = pneg %p835
      $region42: #{tpu_custom_call.1} parent=5 // pred_check_branch
        %838 = sbr.rel (%p836) target = $region44
      $region43: #{tpu_custom_call.1} parent=5 // pred_region
        %s839 = ssub.s32 %s15, 2
        // Predicated region
        $region45: #{tpu_custom_call.1} parent=43 // pred_check
          %p840 = pneg %p91
        $region46: #{tpu_custom_call.1} parent=43 // pred_check_branch
          %842 = sbr.rel (%p840) target = $region48
        $region47: #{tpu_custom_call.1} parent=43 // pred_region
          %s843 = sand.u32 %s76, 1
          %s844 = scalar_lea.sflag [#allocation4], %s843
          %s845 = sand.u32 %s76, 1
          %s846 = smul.addr %s845, 8
          %s847 = scalar_lea.vmem [#allocation7], %s846
          %848 = dma.done %s844, 128
        $region48: #{tpu_custom_call.1} parent=43 // pred_fallthru
          _
      $region44: #{tpu_custom_call.1} parent=5 // pred_fallthru
        _
    $region6: #{tpu_custom_call.1} parent=1 // loop_footer
      %s19 = sadd.s32 1, %s15
    $region7: #{tpu_custom_call.1} parent=1 // loop_footer_branch
      %14 = sbr.rel target = $region3
    $region8: #{tpu_custom_call.1} parent=1 // loop_exit
      _
    %849 = vsyncpa [#allocation3], 1
    %s850 = scalar_lea.sflag [#allocation3], 1
    %851 = vsyncpa %s850, 1
    %852 = vsyncpa [#allocation6], 1
    %853 = vsyncpa [#allocation4], 1
    %s854 = scalar_lea.sflag [#allocation4], 1
    %855 = vsyncpa %s854, 1

</llo_original>
